<compile_context>
chip_gen: v7x
topology: tpu7x:2x2x1
jax: 0.10.0
libtpu: 0.0.40
codegen_flags: <defaults>
</compile_context>

<pallas_src>
import math
from functools import partial

import jax
import jax.numpy as jnp
import numpy as np
from jax import lax
from jax.experimental import pallas as pl
from jax.experimental.pallas import tpu as pltpu


# ----------------------------- Pallas kernel ------------------------------- #

def _fused_forward_kernel(x_ref, w1e_ref, w1o_ref, b1_ref, w2s_ref, b2_ref,
                          wfc_ref, bfc_ref, wh_ref, bh_ref, out_ref, *, nb):
    """One grid step = `nb` images x 4 rotations, end to end.

    Row layouts (R = 4*nb rotation-image rows, rotation-major: rot = k*nb + b):
      conv1 LHS : ph1*(12R) + i1*R + rot      cols ky1*28 + iw         (24R, 196)
      h1        : i1*R + rot                  cols ow1*16 + c          (12R, 176)
      conv2 acc : oh2*R + rot                 cols p2*128 + j2*32 + co ( 8R, 256)
      h2 (per i2): rot                        cols j2*32 + co          (  R, 128)
    """
    f32 = jnp.float32
    bf16 = jnp.bfloat16
    r = 4 * nb

    # ---- conv1 (1->16, 7x7, valid) + 2x2 max-pool: two K=196 dots per conv
    # output-row parity; the 4-way elementwise max IS the 2x2 max-pool.
    lhs0 = x_ref[0, 0:12 * r, :]            # conv-row parity ph1 = 0
    lhs1 = x_ref[0, 12 * r:24 * r, :]       # conv-row parity ph1 = 1
    m = jnp.maximum(jnp.dot(lhs0, w1e_ref[...], preferred_element_type=f32),
                    jnp.dot(lhs0, w1o_ref[...], preferred_element_type=f32))
    m = jnp.maximum(m, jnp.dot(lhs1, w1e_ref[...], preferred_element_type=f32))
    m = jnp.maximum(m, jnp.dot(lhs1, w1o_ref[...], preferred_element_type=f32))
    h1 = jnp.maximum(m + b1_ref[...], 0.0).astype(bf16)        # (12R, 176)

    # ---- conv2 (16->32, 3x3, valid): ky2 handled by 3 contiguous shifted
    # row-slices of h1; both output-column parities stacked on N = 256.
    acc2 = jnp.dot(h1[0 * r:8 * r, :], w2s_ref[0], preferred_element_type=f32)
    acc2 = acc2 + jnp.dot(h1[1 * r:9 * r, :], w2s_ref[1],
                          preferred_element_type=f32)
    acc2 = acc2 + jnp.dot(h1[2 * r:10 * r, :], w2s_ref[2],
                          preferred_element_type=f32)           # (8R, 256)
    m2 = jnp.maximum(acc2[:, 0:128], acc2[:, 128:256])          # width pool

    # ---- pool2 (height) + bias + ReLU + fc (512 -> 128): one dot per pooled
    # height index i2 on contiguous R-row blocks (no scratch, no row stores).
    b2row = b2_ref[...]
    facc = None
    for i2 in range(4):
        blk = jnp.maximum(m2[(2 * i2) * r:(2 * i2 + 1) * r, :],
                          m2[(2 * i2 + 1) * r:(2 * i2 + 2) * r, :])
        h2 = jnp.maximum(blk + b2row, 0.0).astype(bf16)         # (R, 128)
        d = jnp.dot(h2, wfc_ref[i2], preferred_element_type=f32)
        facc = d if facc is None else facc + d
    feat = jnp.maximum(facc + bfc_ref[...], 0.0).astype(bf16)   # (R, 128)

    # ---- head (128 -> 10, zero-padded to 128 lanes) + mean over 4 rotations.
    lg = jnp.dot(feat, wh_ref[...], preferred_element_type=f32) + bh_ref[...]
    mean = (lg[0 * nb:1 * nb, :] + lg[1 * nb:2 * nb, :]
            + lg[2 * nb:3 * nb, :] + lg[3 * nb:4 * nb, :]) * 0.25
    out_ref[0] = mean                                           # (nb, 128)


# -------------------------- Host-side weight prep --------------------------- #

def make_gabor_filters():
    """Gabor filter bank exactly as TrainableGaborConv2d.forward builds it."""
    oc, k = 16, 7
    thetas = jnp.linspace(0.0, jnp.pi - jnp.pi / oc, oc)
    freqs = jnp.tile(jnp.array([0.15, 0.3], dtype=jnp.float32), oc // 2)
    sigmas = jnp.full((oc,), k / 4.5, dtype=jnp.float32)
    psis = jnp.zeros((oc,), dtype=jnp.float32)
    xs = jnp.linspace(-(k - 1) / 2.0, (k - 1) / 2.0, k)
    gx = jnp.tile(xs[None, :], (k, 1))               # grid_x[i, j] = xs[j]
    gy = jnp.tile(xs[:, None], (1, k))               # grid_y[i, j] = xs[i]
    ct = jnp.cos(thetas)[:, None, None]
    st = jnp.sin(thetas)[:, None, None]
    rx = gx[None] * ct + gy[None] * st
    ry = -gx[None] * st + gy[None] * ct
    g = (jnp.exp(-0.5 * (rx ** 2 + ry ** 2) / sigmas[:, None, None] ** 2)
         * jnp.cos(2.0 * jnp.pi * freqs[:, None, None] * rx
                   + psis[:, None, None]))
    return g - g.mean(axis=(1, 2), keepdims=True)    # (16, 7, 7) [c, ky, kx]


def build_kernel_params(raw):
    """Band / stack / permute / pad the raw weights into the kernel layouts."""
    g = np.asarray(raw["g"], np.float32)             # (16, 7, 7)
    w2 = np.asarray(raw["w2"], np.float32)           # (32, 16, 3, 3)

    # conv1 ky-stacked banded weights (K = 7*28 = 196):
    #   w1p[ky*28 + iw, ow1*16 + c] = g[c, ky, iw - (2*ow1 + p)]
    w1e = np.zeros((196, 176), np.float32)
    w1o = np.zeros((196, 176), np.float32)
    for ky in range(7):
        for ow1 in range(11):
            for kx in range(7):
                w1e[ky * 28 + 2 * ow1 + kx, ow1 * 16:(ow1 + 1) * 16] = g[:, ky, kx]
                w1o[ky * 28 + 2 * ow1 + 1 + kx, ow1 * 16:(ow1 + 1) * 16] = g[:, ky, kx]

    # conv2 banded weights with both output-column parities stacked on N:
    #   w2s[ky][ow1*16 + ci, p*128 + j2*32 + co] = w2[co, ci, ky, ow1 - (2*j2 + p)]
    w2s = np.zeros((3, 176, 256), np.float32)
    for ky in range(3):
        for j2 in range(4):
            for kx in range(3):
                blk = w2[:, :, ky, kx].T             # (ci, co)
                oe = 2 * j2 + kx
                oo = 2 * j2 + 1 + kx
                w2s[ky, oe * 16:(oe + 1) * 16, j2 * 32:(j2 + 1) * 32] = blk
                w2s[ky, oo * 16:(oo + 1) * 16,
                    128 + j2 * 32:128 + (j2 + 1) * 32] = blk

    # fc weight: split per pooled-height index i2, permuted to (j2*32 + co):
    #   wfc_parts[i2][j2*32+co, o] = wfc[o, co*16 + i2*4 + j2]
    wfc = np.asarray(raw["wfc"], np.float32).reshape(128, 32, 4, 4)
    wfc_parts = np.transpose(wfc, (2, 3, 1, 0)).reshape(4, 128, 128)

    # head: zero-pad 10 -> 128 output lanes for an unmasked lane-dense store.
    wh = np.zeros((128, 128), np.float32)
    wh[:, :10] = np.asarray(raw["wh"], np.float32).T
    bh = np.zeros((1, 128), np.float32)
    bh[0, :10] = np.asarray(raw["bh"], np.float32)

    return dict(
        w1e=jnp.asarray(w1e, jnp.bfloat16),
        w1o=jnp.asarray(w1o, jnp.bfloat16),
        b1=jnp.asarray(np.tile(np.asarray(raw["b1"], np.float32), 11)[None, :]),
        w2s=jnp.asarray(w2s, jnp.bfloat16),
        b2=jnp.asarray(np.tile(np.asarray(raw["b2"], np.float32), 4)[None, :]),
        wfc=jnp.asarray(wfc_parts, jnp.bfloat16),
        bfc=jnp.asarray(np.asarray(raw["bfc"], np.float32)[None, :]),
        wh=jnp.asarray(wh, jnp.bfloat16),
        bh=jnp.asarray(bh),
    )


def make_params(key):
    k1, k2, k3, k4, k5, k6, k7 = jax.random.split(key, 7)
    lim1 = 1.0 / math.sqrt(1 * 7 * 7)
    lim2 = 1.0 / math.sqrt(16 * 3 * 3)
    lim3 = 1.0 / math.sqrt(512)
    lim4 = 1.0 / math.sqrt(128)
    raw = dict(
        g=make_gabor_filters(),
        b1=jax.random.uniform(k1, (16,), jnp.float32, -lim1, lim1),
        w2=jax.random.uniform(k2, (32, 16, 3, 3), jnp.float32, -lim2, lim2),
        b2=jax.random.uniform(k3, (32,), jnp.float32, -lim2, lim2),
        wfc=jax.random.uniform(k4, (128, 512), jnp.float32, -lim3, lim3),
        bfc=jax.random.uniform(k5, (128,), jnp.float32, -lim3, lim3),
        wh=jax.random.uniform(k6, (10, 128), jnp.float32, -lim4, lim4),
        bh=jax.random.uniform(k7, (10,), jnp.float32, -lim4, lim4),
    )
    return build_kernel_params(raw), raw


# ------------------------------- Forward ------------------------------------ #

def _pick_images_per_step(batch):
    """Largest images/step in {2, 1} dividing the batch while keeping >= 2 grid
    steps (so both v7x TensorCores get work).  Capped at 2 for vreg pressure."""
    for nb in (2, 1):
        if batch % nb == 0 and batch // nb >= 2:
            return nb
    return 1


def _build_conv1_lhs(x, nb):
    """(B,1,28,28) f32 -> (G, 96*nb, 196) bf16 pre-shifted conv1 LHS.

    Row within a step: ph1*(12R) + i1*R + (k*nb + b_local), R = 4*nb; the 12th
    i1 block is padding (sublane alignment).  Column: ky1*28 + iw.
    """
    B = x.shape[0]
    G = B // nb
    xr = jnp.stack([jnp.rot90(x[:, 0], k, axes=(1, 2)) for k in range(4)],
                   axis=1)                                    # (B, 4, 28, 28)
    xg = xr.reshape(G, nb, 4, 28, 28)
    ph = np.arange(2)[:, None, None]
    i1 = np.arange(12)[None, :, None]
    ky = np.arange(7)[None, None, :]
    src = np.minimum(2 * i1 + ph + ky, 27)                    # (2, 12, 7)
    gat = xg[:, :, :, src, :]                                 # (G,nb,4,2,12,7,28)
    gat = jnp.transpose(gat, (0, 3, 4, 2, 1, 5, 6))           # (G,2,12,4,nb,7,28)
    return gat.reshape(G, 2 * 12 * 4 * nb, 7 * 28).astype(jnp.bfloat16)


def rotation_invariant_gabor_cnn(x, kp):
    """x: (B, 1, 28, 28) float32 -> logits (B, 10)."""
    B = x.shape[0]
    nb = _pick_images_per_step(B)
    G = B // nb
    r = 4 * nb
    lhs = _build_conv1_lhs(x, nb)                             # (G, 24r, 196) bf16

    c2 = lambda g: (0, 0)
    c3 = lambda g: (0, 0, 0)
    out = pl.pallas_call(
        partial(_fused_forward_kernel, nb=nb),
        out_shape=jax.ShapeDtypeStruct((G, nb, 128), jnp.float32),
        grid=(G,),
        in_specs=[
            pl.BlockSpec((1, 24 * r, 196), lambda g: (g, 0, 0)),  # conv1 LHS
            pl.BlockSpec((196, 176), c2),                         # w1 even
            pl.BlockSpec((196, 176), c2),                         # w1 odd
            pl.BlockSpec((1, 176), c2),                           # b1 (tiled)
            pl.BlockSpec((3, 176, 256), c3),                      # w2 stacked
            pl.BlockSpec((1, 128), c2),                           # b2 (tiled)
            pl.BlockSpec((4, 128, 128), c3),                      # fc parts
            pl.BlockSpec((1, 128), c2),                           # bfc
            pl.BlockSpec((128, 128), c2),                         # head (padded)
            pl.BlockSpec((1, 128), c2),                           # bh (padded)
        ],
        out_specs=pl.BlockSpec((1, nb, 128), lambda g: (g, 0, 0)),
        compiler_params=pltpu.CompilerParams(
            dimension_semantics=("parallel",),
            vmem_limit_bytes=32 * 1024 * 1024,
        ),
    )(lhs, kp["w1e"], kp["w1o"], kp["b1"], kp["w2s"], kp["b2"],
      kp["wfc"], kp["bfc"], kp["wh"], kp["bh"])
    return out.reshape(B, 128)[:, :10]


# --------------------------- Pure-JAX reference ----------------------------- #

def _pool2x2(y):
    b, c, h, w = y.shape
    y = y[:, :, :(h // 2) * 2, :(w // 2) * 2]
    return y.reshape(b, c, h // 2, 2, w // 2, 2).max(axis=(3, 5))


def reference_forward(x, raw):
    """XLA reference with identical semantics (f32), for validation."""
    dn = ("NCHW", "OIHW", "NCHW")

    def backbone_head(xi):
        w1 = raw["g"][:, None]                                   # (16,1,7,7)
        y = lax.conv_general_dilated(xi, w1, (1, 1), "VALID",
                                     dimension_numbers=dn)
        y = _pool2x2(jax.nn.relu(y + raw["b1"][None, :, None, None]))
        y = lax.conv_general_dilated(y, raw["w2"], (1, 1), "VALID",
                                     dimension_numbers=dn)
        y = _pool2x2(jax.nn.relu(y + raw["b2"][None, :, None, None]))
        f = jax.nn.relu(y.reshape(y.shape[0], -1) @ raw["wfc"].T + raw["bfc"])
        return f @ raw["wh"].T + raw["bh"]

    logits = [backbone_head(x if k == 0 else jnp.rot90(x, k, axes=(2, 3)))
              for k in range(4)]
    return jnp.mean(jnp.stack(logits, 0), 0)


# --------------------------------- Main -------------------------------------- #

if __name__ == "__main__":
    key = jax.random.PRNGKey(0)
    kp_key, kx_key = jax.random.split(key)
    kparams, raw_params = make_params(kp_key)
    # 28x28 inputs so the flattened backbone feature is 32*4*4 = 512.
    x = jax.random.normal(kx_key, (2, 1, 28, 28), dtype=jnp.float32)

    fwd = jax.jit(rotation_invariant_gabor_cnn)
    out = fwd(x, kparams)
    jax.block_until_ready(out)
    assert out.shape == (2, 10), out.shape

    # Loose tolerance: the kernel uses bf16 MXU operands with f32 accumulation.
    ref = reference_forward(x, raw_params)
    err = float(jnp.max(jnp.abs(out - ref)))
    assert err < 0.2, f"kernel/reference mismatch: max abs err = {err}"
    print("KERNEL_OK")
</pallas_src>

<mosaic_0001>
module attributes {stable_mosaic.version = 11 : i64} {
  func.func @_fused_forward_kernel(%arg0: i32, %arg1: memref<1x96x196xbf16, #tpu.memory_space<vmem>>, %arg2: memref<196x176xbf16, #tpu.memory_space<vmem>>, %arg3: memref<196x176xbf16, #tpu.memory_space<vmem>>, %arg4: memref<1x176xf32, #tpu.memory_space<vmem>>, %arg5: memref<3x176x256xbf16, #tpu.memory_space<vmem>>, %arg6: memref<1x128xf32, #tpu.memory_space<vmem>>, %arg7: memref<4x128x128xbf16, #tpu.memory_space<vmem>>, %arg8: memref<1x128xf32, #tpu.memory_space<vmem>>, %arg9: memref<128x128xbf16, #tpu.memory_space<vmem>>, %arg10: memref<1x128xf32, #tpu.memory_space<vmem>>, %arg11: memref<1x1x128xf32, #tpu.memory_space<vmem>>) attributes {dimension_semantics = [#tpu.dimension_semantics<parallel>], iteration_bounds = array<i64: 2>, scalar_prefetch = 0 : i64, scratch_operands = 0 : i64, tpu.core_type = #tpu.core_type<tc>, window_params = [{transform_indices = @transform_0, window_bounds = array<i64: 1, 96, 196>}, {pipeline_mode = #tpu.pipeline_mode<synchronous>, transform_indices = @transform_1, window_bounds = array<i64: 196, 176>}, {pipeline_mode = #tpu.pipeline_mode<synchronous>, transform_indices = @transform_2, window_bounds = array<i64: 196, 176>}, {pipeline_mode = #tpu.pipeline_mode<synchronous>, transform_indices = @transform_3, window_bounds = array<i64: 1, 176>}, {pipeline_mode = #tpu.pipeline_mode<synchronous>, transform_indices = @transform_4, window_bounds = array<i64: 3, 176, 256>}, {pipeline_mode = #tpu.pipeline_mode<synchronous>, transform_indices = @transform_5, window_bounds = array<i64: 1, 128>}, {pipeline_mode = #tpu.pipeline_mode<synchronous>, transform_indices = @transform_6, window_bounds = array<i64: 4, 128, 128>}, {pipeline_mode = #tpu.pipeline_mode<synchronous>, transform_indices = @transform_7, window_bounds = array<i64: 1, 128>}, {pipeline_mode = #tpu.pipeline_mode<synchronous>, transform_indices = @transform_8, window_bounds = array<i64: 128, 128>}, {pipeline_mode = #tpu.pipeline_mode<synchronous>, transform_indices = @transform_9, window_bounds = array<i64: 1, 128>}, {transform_indices = @transform_10, window_bounds = array<i64: 1, 1, 128>}]} {
    %c0 = arith.constant 0 : index
    %c0_0 = arith.constant 0 : index
    %c0_1 = arith.constant 0 : index
    %0 = vector.load %arg1[%c0, %c0_0, %c0_1] : memref<1x96x196xbf16, #tpu.memory_space<vmem>>, vector<1x48x196xbf16>
    %1 = vector.shape_cast %0 : vector<1x48x196xbf16> to vector<48x196xbf16>
    %c0_2 = arith.constant 0 : index
    %c48 = arith.constant 48 : index
    %c0_3 = arith.constant 0 : index
    %2 = vector.load %arg1[%c0_2, %c48, %c0_3] : memref<1x96x196xbf16, #tpu.memory_space<vmem>>, vector<1x48x196xbf16>
    %3 = vector.shape_cast %2 : vector<1x48x196xbf16> to vector<48x196xbf16>
    %c0_4 = arith.constant 0 : index
    %c0_5 = arith.constant 0 : index
    %4 = vector.load %arg2[%c0_4, %c0_5] : memref<196x176xbf16, #tpu.memory_space<vmem>>, vector<196x176xbf16>
    %cst = arith.constant dense<0.000000e+00> : vector<48x176xf32>
    %5 = tpu.matmul %1, %4, %cst {dimension_numbers = #tpu.dot_dimension_numbers<[1], [0], [0], [1], [0, 0, 1, 1], [], []>} : vector<48x196xbf16>, vector<196x176xbf16>, vector<48x176xf32> -> vector<48x176xf32>
    %c0_6 = arith.constant 0 : index
    %c0_7 = arith.constant 0 : index
    %6 = vector.load %arg3[%c0_6, %c0_7] : memref<196x176xbf16, #tpu.memory_space<vmem>>, vector<196x176xbf16>
    %cst_8 = arith.constant dense<0.000000e+00> : vector<48x176xf32>
    %7 = tpu.matmul %1, %6, %cst_8 {dimension_numbers = #tpu.dot_dimension_numbers<[1], [0], [0], [1], [0, 0, 1, 1], [], []>} : vector<48x196xbf16>, vector<196x176xbf16>, vector<48x176xf32> -> vector<48x176xf32>
    %8 = arith.maximumf %5, %7 : vector<48x176xf32>
    %c0_9 = arith.constant 0 : index
    %c0_10 = arith.constant 0 : index
    %9 = vector.load %arg2[%c0_9, %c0_10] : memref<196x176xbf16, #tpu.memory_space<vmem>>, vector<196x176xbf16>
    %cst_11 = arith.constant dense<0.000000e+00> : vector<48x176xf32>
    %10 = tpu.matmul %3, %9, %cst_11 {dimension_numbers = #tpu.dot_dimension_numbers<[1], [0], [0], [1], [0, 0, 1, 1], [], []>} : vector<48x196xbf16>, vector<196x176xbf16>, vector<48x176xf32> -> vector<48x176xf32>
    %11 = arith.maximumf %8, %10 : vector<48x176xf32>
    %c0_12 = arith.constant 0 : index
    %c0_13 = arith.constant 0 : index
    %12 = vector.load %arg3[%c0_12, %c0_13] : memref<196x176xbf16, #tpu.memory_space<vmem>>, vector<196x176xbf16>
    %cst_14 = arith.constant dense<0.000000e+00> : vector<48x176xf32>
    %13 = tpu.matmul %3, %12, %cst_14 {dimension_numbers = #tpu.dot_dimension_numbers<[1], [0], [0], [1], [0, 0, 1, 1], [], []>} : vector<48x196xbf16>, vector<196x176xbf16>, vector<48x176xf32> -> vector<48x176xf32>
    %14 = arith.maximumf %11, %13 : vector<48x176xf32>
    %c0_15 = arith.constant 0 : index
    %c0_16 = arith.constant 0 : index
    %15 = vector.load %arg4[%c0_15, %c0_16] : memref<1x176xf32, #tpu.memory_space<vmem>>, vector<1x176xf32>
    %16 = vector.broadcast %15 : vector<1x176xf32> to vector<48x176xf32>
    %17 = arith.addf %14, %16 : vector<48x176xf32>
    %cst_17 = arith.constant 0.000000e+00 : f32
    %18 = vector.broadcast %cst_17 : f32 to vector<48x176xf32>
    %19 = arith.maximumf %17, %18 : vector<48x176xf32>
    %20 = arith.truncf %19 : vector<48x176xf32> to vector<48x176xbf16>
    %21 = vector.extract_strided_slice %20 {offsets = [0, 0], sizes = [32, 176], strides = [1, 1]} : vector<48x176xbf16> to vector<32x176xbf16>
    %c0_18 = arith.constant 0 : index
    %c0_19 = arith.constant 0 : index
    %c0_20 = arith.constant 0 : index
    %22 = vector.load %arg5[%c0_18, %c0_19, %c0_20] : memref<3x176x256xbf16, #tpu.memory_space<vmem>>, vector<1x176x256xbf16>
    %23 = vector.shape_cast %22 : vector<1x176x256xbf16> to vector<176x256xbf16>
    %cst_21 = arith.constant dense<0.000000e+00> : vector<32x256xf32>
    %24 = tpu.matmul %21, %23, %cst_21 {dimension_numbers = #tpu.dot_dimension_numbers<[1], [0], [0], [1], [0, 0, 1, 1], [], []>} : vector<32x176xbf16>, vector<176x256xbf16>, vector<32x256xf32> -> vector<32x256xf32>
    %25 = vector.extract_strided_slice %20 {offsets = [4, 0], sizes = [32, 176], strides = [1, 1]} : vector<48x176xbf16> to vector<32x176xbf16>
    %c1 = arith.constant 1 : index
    %c0_22 = arith.constant 0 : index
    %c0_23 = arith.constant 0 : index
    %26 = vector.load %arg5[%c1, %c0_22, %c0_23] : memref<3x176x256xbf16, #tpu.memory_space<vmem>>, vector<1x176x256xbf16>
    %27 = vector.shape_cast %26 : vector<1x176x256xbf16> to vector<176x256xbf16>
    %cst_24 = arith.constant dense<0.000000e+00> : vector<32x256xf32>
    %28 = tpu.matmul %25, %27, %cst_24 {dimension_numbers = #tpu.dot_dimension_numbers<[1], [0], [0], [1], [0, 0, 1, 1], [], []>} : vector<32x176xbf16>, vector<176x256xbf16>, vector<32x256xf32> -> vector<32x256xf32>
    %29 = arith.addf %24, %28 : vector<32x256xf32>
    %30 = vector.extract_strided_slice %20 {offsets = [8, 0], sizes = [32, 176], strides = [1, 1]} : vector<48x176xbf16> to vector<32x176xbf16>
    %c2 = arith.constant 2 : index
    %c0_25 = arith.constant 0 : index
    %c0_26 = arith.constant 0 : index
    %31 = vector.load %arg5[%c2, %c0_25, %c0_26] : memref<3x176x256xbf16, #tpu.memory_space<vmem>>, vector<1x176x256xbf16>
    %32 = vector.shape_cast %31 : vector<1x176x256xbf16> to vector<176x256xbf16>
    %cst_27 = arith.constant dense<0.000000e+00> : vector<32x256xf32>
    %33 = tpu.matmul %30, %32, %cst_27 {dimension_numbers = #tpu.dot_dimension_numbers<[1], [0], [0], [1], [0, 0, 1, 1], [], []>} : vector<32x176xbf16>, vector<176x256xbf16>, vector<32x256xf32> -> vector<32x256xf32>
    %34 = arith.addf %29, %33 : vector<32x256xf32>
    %35 = vector.extract_strided_slice %34 {offsets = [0, 0], sizes = [32, 128], strides = [1, 1]} : vector<32x256xf32> to vector<32x128xf32>
    %36 = vector.extract_strided_slice %34 {offsets = [0, 128], sizes = [32, 128], strides = [1, 1]} : vector<32x256xf32> to vector<32x128xf32>
    %37 = arith.maximumf %35, %36 : vector<32x128xf32>
    %c0_28 = arith.constant 0 : index
    %c0_29 = arith.constant 0 : index
    %38 = vector.load %arg6[%c0_28, %c0_29] : memref<1x128xf32, #tpu.memory_space<vmem>>, vector<1x128xf32>
    %39 = vector.extract_strided_slice %37 {offsets = [0, 0], sizes = [4, 128], strides = [1, 1]} : vector<32x128xf32> to vector<4x128xf32>
    %40 = vector.extract_strided_slice %37 {offsets = [4, 0], sizes = [4, 128], strides = [1, 1]} : vector<32x128xf32> to vector<4x128xf32>
    %41 = arith.maximumf %39, %40 : vector<4x128xf32>
    %42 = vector.broadcast %38 : vector<1x128xf32> to vector<4x128xf32>
    %43 = arith.addf %41, %42 : vector<4x128xf32>
    %cst_30 = arith.constant 0.000000e+00 : f32
    %44 = vector.broadcast %cst_30 : f32 to vector<4x128xf32>
    %45 = arith.maximumf %43, %44 : vector<4x128xf32>
    %46 = arith.truncf %45 : vector<4x128xf32> to vector<4x128xbf16>
    %c0_31 = arith.constant 0 : index
    %c0_32 = arith.constant 0 : index
    %c0_33 = arith.constant 0 : index
    %47 = vector.load %arg7[%c0_31, %c0_32, %c0_33] : memref<4x128x128xbf16, #tpu.memory_space<vmem>>, vector<1x128x128xbf16>
    %48 = vector.shape_cast %47 : vector<1x128x128xbf16> to vector<128x128xbf16>
    %cst_34 = arith.constant dense<0.000000e+00> : vector<4x128xf32>
    %49 = tpu.matmul %46, %48, %cst_34 {dimension_numbers = #tpu.dot_dimension_numbers<[1], [0], [0], [1], [0, 0, 1, 1], [], []>} : vector<4x128xbf16>, vector<128x128xbf16>, vector<4x128xf32> -> vector<4x128xf32>
    %50 = vector.extract_strided_slice %37 {offsets = [8, 0], sizes = [4, 128], strides = [1, 1]} : vector<32x128xf32> to vector<4x128xf32>
    %51 = vector.extract_strided_slice %37 {offsets = [12, 0], sizes = [4, 128], strides = [1, 1]} : vector<32x128xf32> to vector<4x128xf32>
    %52 = arith.maximumf %50, %51 : vector<4x128xf32>
    %53 = vector.broadcast %38 : vector<1x128xf32> to vector<4x128xf32>
    %54 = arith.addf %52, %53 : vector<4x128xf32>
    %cst_35 = arith.constant 0.000000e+00 : f32
    %55 = vector.broadcast %cst_35 : f32 to vector<4x128xf32>
    %56 = arith.maximumf %54, %55 : vector<4x128xf32>
    %57 = arith.truncf %56 : vector<4x128xf32> to vector<4x128xbf16>
    %c1_36 = arith.constant 1 : index
    %c0_37 = arith.constant 0 : index
    %c0_38 = arith.constant 0 : index
    %58 = vector.load %arg7[%c1_36, %c0_37, %c0_38] : memref<4x128x128xbf16, #tpu.memory_space<vmem>>, vector<1x128x128xbf16>
    %59 = vector.shape_cast %58 : vector<1x128x128xbf16> to vector<128x128xbf16>
    %cst_39 = arith.constant dense<0.000000e+00> : vector<4x128xf32>
    %60 = tpu.matmul %57, %59, %cst_39 {dimension_numbers = #tpu.dot_dimension_numbers<[1], [0], [0], [1], [0, 0, 1, 1], [], []>} : vector<4x128xbf16>, vector<128x128xbf16>, vector<4x128xf32> -> vector<4x128xf32>
    %61 = arith.addf %49, %60 : vector<4x128xf32>
    %62 = vector.extract_strided_slice %37 {offsets = [16, 0], sizes = [4, 128], strides = [1, 1]} : vector<32x128xf32> to vector<4x128xf32>
    %63 = vector.extract_strided_slice %37 {offsets = [20, 0], sizes = [4, 128], strides = [1, 1]} : vector<32x128xf32> to vector<4x128xf32>
    %64 = arith.maximumf %62, %63 : vector<4x128xf32>
    %65 = vector.broadcast %38 : vector<1x128xf32> to vector<4x128xf32>
    %66 = arith.addf %64, %65 : vector<4x128xf32>
    %cst_40 = arith.constant 0.000000e+00 : f32
    %67 = vector.broadcast %cst_40 : f32 to vector<4x128xf32>
    %68 = arith.maximumf %66, %67 : vector<4x128xf32>
    %69 = arith.truncf %68 : vector<4x128xf32> to vector<4x128xbf16>
    %c2_41 = arith.constant 2 : index
    %c0_42 = arith.constant 0 : index
    %c0_43 = arith.constant 0 : index
    %70 = vector.load %arg7[%c2_41, %c0_42, %c0_43] : memref<4x128x128xbf16, #tpu.memory_space<vmem>>, vector<1x128x128xbf16>
    %71 = vector.shape_cast %70 : vector<1x128x128xbf16> to vector<128x128xbf16>
    %cst_44 = arith.constant dense<0.000000e+00> : vector<4x128xf32>
    %72 = tpu.matmul %69, %71, %cst_44 {dimension_numbers = #tpu.dot_dimension_numbers<[1], [0], [0], [1], [0, 0, 1, 1], [], []>} : vector<4x128xbf16>, vector<128x128xbf16>, vector<4x128xf32> -> vector<4x128xf32>
    %73 = arith.addf %61, %72 : vector<4x128xf32>
    %74 = vector.extract_strided_slice %37 {offsets = [24, 0], sizes = [4, 128], strides = [1, 1]} : vector<32x128xf32> to vector<4x128xf32>
    %75 = vector.extract_strided_slice %37 {offsets = [28, 0], sizes = [4, 128], strides = [1, 1]} : vector<32x128xf32> to vector<4x128xf32>
    %76 = arith.maximumf %74, %75 : vector<4x128xf32>
    %77 = vector.broadcast %38 : vector<1x128xf32> to vector<4x128xf32>
    %78 = arith.addf %76, %77 : vector<4x128xf32>
    %cst_45 = arith.constant 0.000000e+00 : f32
    %79 = vector.broadcast %cst_45 : f32 to vector<4x128xf32>
    %80 = arith.maximumf %78, %79 : vector<4x128xf32>
    %81 = arith.truncf %80 : vector<4x128xf32> to vector<4x128xbf16>
    %c3 = arith.constant 3 : index
    %c0_46 = arith.constant 0 : index
    %c0_47 = arith.constant 0 : index
    %82 = vector.load %arg7[%c3, %c0_46, %c0_47] : memref<4x128x128xbf16, #tpu.memory_space<vmem>>, vector<1x128x128xbf16>
    %83 = vector.shape_cast %82 : vector<1x128x128xbf16> to vector<128x128xbf16>
    %cst_48 = arith.constant dense<0.000000e+00> : vector<4x128xf32>
    %84 = tpu.matmul %81, %83, %cst_48 {dimension_numbers = #tpu.dot_dimension_numbers<[1], [0], [0], [1], [0, 0, 1, 1], [], []>} : vector<4x128xbf16>, vector<128x128xbf16>, vector<4x128xf32> -> vector<4x128xf32>
    %85 = arith.addf %73, %84 : vector<4x128xf32>
    %c0_49 = arith.constant 0 : index
    %c0_50 = arith.constant 0 : index
    %86 = vector.load %arg8[%c0_49, %c0_50] : memref<1x128xf32, #tpu.memory_space<vmem>>, vector<1x128xf32>
    %87 = vector.broadcast %86 : vector<1x128xf32> to vector<4x128xf32>
    %88 = arith.addf %85, %87 : vector<4x128xf32>
    %cst_51 = arith.constant 0.000000e+00 : f32
    %89 = vector.broadcast %cst_51 : f32 to vector<4x128xf32>
    %90 = arith.maximumf %88, %89 : vector<4x128xf32>
    %91 = arith.truncf %90 : vector<4x128xf32> to vector<4x128xbf16>
    %c0_52 = arith.constant 0 : index
    %c0_53 = arith.constant 0 : index
    %92 = vector.load %arg9[%c0_52, %c0_53] : memref<128x128xbf16, #tpu.memory_space<vmem>>, vector<128x128xbf16>
    %cst_54 = arith.constant dense<0.000000e+00> : vector<4x128xf32>
    %93 = tpu.matmul %91, %92, %cst_54 {dimension_numbers = #tpu.dot_dimension_numbers<[1], [0], [0], [1], [0, 0, 1, 1], [], []>} : vector<4x128xbf16>, vector<128x128xbf16>, vector<4x128xf32> -> vector<4x128xf32>
    %c0_55 = arith.constant 0 : index
    %c0_56 = arith.constant 0 : index
    %94 = vector.load %arg10[%c0_55, %c0_56] : memref<1x128xf32, #tpu.memory_space<vmem>>, vector<1x128xf32>
    %95 = vector.broadcast %94 : vector<1x128xf32> to vector<4x128xf32>
    %96 = arith.addf %93, %95 : vector<4x128xf32>
    %97 = vector.extract_strided_slice %96 {offsets = [0, 0], sizes = [1, 128], strides = [1, 1]} : vector<4x128xf32> to vector<1x128xf32>
    %98 = vector.extract_strided_slice %96 {offsets = [1, 0], sizes = [1, 128], strides = [1, 1]} : vector<4x128xf32> to vector<1x128xf32>
    %99 = arith.addf %97, %98 : vector<1x128xf32>
    %100 = vector.extract_strided_slice %96 {offsets = [2, 0], sizes = [1, 128], strides = [1, 1]} : vector<4x128xf32> to vector<1x128xf32>
    %101 = arith.addf %99, %100 : vector<1x128xf32>
    %102 = vector.extract_strided_slice %96 {offsets = [3, 0], sizes = [1, 128], strides = [1, 1]} : vector<4x128xf32> to vector<1x128xf32>
    %103 = arith.addf %101, %102 : vector<1x128xf32>
    %cst_57 = arith.constant 2.500000e-01 : f32
    %104 = vector.broadcast %cst_57 : f32 to vector<1x128xf32>
    %105 = arith.mulf %103, %104 : vector<1x128xf32>
    %c0_58 = arith.constant 0 : index
    %c0_59 = arith.constant 0 : index
    %c0_60 = arith.constant 0 : index
    %106 = vector.load %arg11[%c0_58, %c0_59, %c0_60] : memref<1x1x128xf32, #tpu.memory_space<vmem>>, vector<1x1x128xf32>
    %107 = vector.shape_cast %106 : vector<1x1x128xf32> to vector<1x128xf32>
    %108 = vector.shape_cast %105 : vector<1x128xf32> to vector<1x1x128xf32>
    tpu.vector_store %arg11[%c0_58, %c0_59, %c0_60], %108 {strides = array<i32>} : memref<1x1x128xf32, #tpu.memory_space<vmem>>, vector<1x1x128xf32>,
    return
  }
  func.func @transform_0(%arg0: i32) -> (i32, i32, i32) {
    %c0_i32 = arith.constant 0 : i32
    %c0_i32_0 = arith.constant 0 : i32
    %c0_i32_1 = arith.constant 0 : i32
    return %arg0, %c0_i32, %c0_i32_0 : i32, i32, i32
  }
  func.func @transform_1(%arg0: i32) -> (i32, i32) {
    %c0_i32 = arith.constant 0 : i32
    %c0_i32_0 = arith.constant 0 : i32
    %c0_i32_1 = arith.constant 0 : i32
    return %c0_i32, %c0_i32_0 : i32, i32
  }
  func.func @transform_2(%arg0: i32) -> (i32, i32) {
    %c0_i32 = arith.constant 0 : i32
    %c0_i32_0 = arith.constant 0 : i32
    %c0_i32_1 = arith.constant 0 : i32
    return %c0_i32, %c0_i32_0 : i32, i32
  }
  func.func @transform_3(%arg0: i32) -> (i32, i32) {
    %c0_i32 = arith.constant 0 : i32
    %c0_i32_0 = arith.constant 0 : i32
    %c0_i32_1 = arith.constant 0 : i32
    return %c0_i32, %c0_i32_0 : i32, i32
  }
  func.func @transform_4(%arg0: i32) -> (i32, i32, i32) {
    %c0_i32 = arith.constant 0 : i32
    %c0_i32_0 = arith.constant 0 : i32
    %c0_i32_1 = arith.constant 0 : i32
    %c0_i32_2 = arith.constant 0 : i32
    return %c0_i32, %c0_i32_0, %c0_i32_1 : i32, i32, i32
  }
  func.func @transform_5(%arg0: i32) -> (i32, i32) {
    %c0_i32 = arith.constant 0 : i32
    %c0_i32_0 = arith.constant 0 : i32
    %c0_i32_1 = arith.constant 0 : i32
    return %c0_i32, %c0_i32_0 : i32, i32
  }
  func.func @transform_6(%arg0: i32) -> (i32, i32, i32) {
    %c0_i32 = arith.constant 0 : i32
    %c0_i32_0 = arith.constant 0 : i32
    %c0_i32_1 = arith.constant 0 : i32
    %c0_i32_2 = arith.constant 0 : i32
    return %c0_i32, %c0_i32_0, %c0_i32_1 : i32, i32, i32
  }
  func.func @transform_7(%arg0: i32) -> (i32, i32) {
    %c0_i32 = arith.constant 0 : i32
    %c0_i32_0 = arith.constant 0 : i32
    %c0_i32_1 = arith.constant 0 : i32
    return %c0_i32, %c0_i32_0 : i32, i32
  }
  func.func @transform_8(%arg0: i32) -> (i32, i32) {
    %c0_i32 = arith.constant 0 : i32
    %c0_i32_0 = arith.constant 0 : i32
    %c0_i32_1 = arith.constant 0 : i32
    return %c0_i32, %c0_i32_0 : i32, i32
  }
  func.func @transform_9(%arg0: i32) -> (i32, i32) {
    %c0_i32 = arith.constant 0 : i32
    %c0_i32_0 = arith.constant 0 : i32
    %c0_i32_1 = arith.constant 0 : i32
    return %c0_i32, %c0_i32_0 : i32, i32
  }
  func.func @transform_10(%arg0: i32) -> (i32, i32, i32) {
    %c0_i32 = arith.constant 0 : i32
    %c0_i32_0 = arith.constant 0 : i32
    %c0_i32_1 = arith.constant 0 : i32
    return %arg0, %c0_i32, %c0_i32_0 : i32, i32, i32
  }
}

</mosaic_0001>

<llo_original>
// kernel: rotation_invariant_gabor_cnn.1
$region0: #{rotation_invariant_gabor_cnn.1}
  #allocation0 [shape = 'u32[]', space=smem, size = 0x4, offset = 0x4, fixed_abs, tag = 'smem constant byte address 0x4 - core index']
  #allocation1 [shape = 'u32[144,128]{1,0:T(1,128)}', space=vmem, size = 0x12000, scoped, tag = 'internal scratch']
  %s0 = inlined_call_operand.vmem [shape: bf16[2,96,196], index: 0, kind: input, shape index: {}]
  %s1 = inlined_call_operand.vmem [shape: bf16[196,176], index: 1, kind: input, shape index: {}]
  %s2 = inlined_call_operand.vmem [shape: bf16[196,176], index: 2, kind: input, shape index: {}]
  %s3 = inlined_call_operand.vmem [shape: f32[1,176], index: 3, kind: input, shape index: {}]
  %s4 = inlined_call_operand.vmem [shape: bf16[3,176,256], index: 4, kind: input, shape index: {}]
  %s5 = inlined_call_operand.vmem [shape: f32[1,128], index: 5, kind: input, shape index: {}]
  %s6 = inlined_call_operand.vmem [shape: bf16[4,128,128], index: 6, kind: input, shape index: {}]
  %s7 = inlined_call_operand.vmem [shape: f32[1,128], index: 7, kind: input, shape index: {}]
  %s8 = inlined_call_operand.vmem [shape: bf16[128,128], index: 8, kind: input, shape index: {}]
  %s9 = inlined_call_operand.vmem [shape: f32[1,128], index: 9, kind: input, shape index: {}]
  %s10 = inlined_call_operand.hbm [shape: f32[2,1,128], index: 10, kind: output, shape index: {}]
  %s11 = sld [smem:[#allocation0]]
  $region73: #{rotation_invariant_gabor_cnn.1} parent=0
    _
  %s13 = ssub.s32 1, %s11
  %s14 = scalar_select 0, %s13, %s11
  $region1: #{rotation_invariant_gabor_cnn.1} parent=0
    #allocation2 [shape = 'u8[1024]{0}', space=vmem, size = 0x400, scoped, tag = 'output window, operand 0']
    #allocation3 [shape = 's32[2]{0}', space=sflag, size = 0x8, scoped, tag = 'scoped memory for rotation_invariant_gabor_cnn.1']
    %15 = vsyncpa [#allocation3], 0
    %s16 = scalar_lea.sflag [#allocation3], 1
    %17 = vsyncpa %s16, 0
    loop: start=0, step=1, limit=4
    $region2: #{rotation_invariant_gabor_cnn.1} parent=1 // loop_pre_header
      _
    $region3: #{rotation_invariant_gabor_cnn.1} parent=1 // loop_header
      %s19 = sphi 0, %s23
      %p20 = scmp.ge.s32.totalorder %s19, 4
      %s29 = sphi 0, %s31
      %s32 = sphi 0, %s29
      %s33 = sphi 0, %s32
      %s49 = sphi 0, %s33
      %s53 = sphi 0, %s53
      %s55 = sphi 0, %s53
      %s56 = sphi 0, %s55
      %s70 = sphi 0, %s56
      %s74 = sphi 0, %s74
      %s76 = sphi 0, %s74
      %s77 = sphi 0, %s76
      %s91 = sphi 0, %s77
      %s95 = sphi 0, %s95
      %s97 = sphi 0, %s95
      %s98 = sphi 0, %s97
      %s112 = sphi 0, %s98
      %s116 = sphi 0, %s116
      %s118 = sphi 0, %s116
      %s119 = sphi 0, %s118
      %s133 = sphi 0, %s119
      %s137 = sphi 0, %s137
      %s139 = sphi 0, %s137
      %s140 = sphi 0, %s139
      %s154 = sphi 0, %s140
      %s158 = sphi 0, %s158
      %s160 = sphi 0, %s158
      %s161 = sphi 0, %s160
      %s175 = sphi 0, %s161
      %s179 = sphi 0, %s179
      %s181 = sphi 0, %s179
      %s182 = sphi 0, %s181
      %s196 = sphi 0, %s182
      %s200 = sphi 0, %s200
      %s202 = sphi 0, %s200
      %s203 = sphi 0, %s202
      %s217 = sphi 0, %s203
      %s221 = sphi 0, %s221
      %s223 = sphi 0, %s221
      %s224 = sphi 0, %s223
      %s238 = sphi 0, %s224
      %s244 = sphi 0, %s246
      %s247 = sphi 0, %s244
      %s248 = sphi 0, %s247
      %s264 = sphi 0, %s248
    $region4: #{rotation_invariant_gabor_cnn.1} parent=1 // loop_header_branch
      %22 = sbr.rel (%p20) target = $region8
    $region5: #{rotation_invariant_gabor_cnn.1} parent=1 // loop_body
      %s24 = ssub.s32 %s19, 1
      %s25 = ssub.s32 %s19, 2
      %s26 = sadd.s32 %s19, 1
      %s27 = ssub.s32 %s19, %s26
      %p28 = scmp.eq.s32.totalorder %s27, 0
      %s30 = sadd.s32 %s29, 1
      %s31 = scalar_select %p28, %s29, %s30
      %p34 = pneg %p28
      %p35 = scmp.eq.s32.totalorder %s19, 1
      %p36 = por %p34, %p35
      %p37 = scmp.ne.s32.totalorder %s29, %s32
      %p38 = scmp.eq.s32.totalorder %s19, 0
      %p39 = por %p37, %p38
      %p40 = scmp.ne.s32.totalorder %s29, %s32
      %p41 = scmp.eq.s32.totalorder %s24, 1
      %p42 = por %p40, %p41
      %p43 = scmp.ne.s32.totalorder %s32, %s33
      %p44 = scmp.eq.s32.totalorder %s24, 0
      %p45 = por %p43, %p44
      %p46 = scmp.ne.s32.totalorder %s32, %s33
      %p47 = scmp.eq.s32.totalorder %s25, 1
      %p48 = por %p46, %p47
      %p50 = scmp.ne.s32.totalorder %s33, %s49
      %p51 = scmp.eq.s32.totalorder %s25, 0
      %p52 = por %p50, %p51
      %s54 = sadd.s32 %s53, 1
      %p57 = scmp.eq.s32.totalorder %s19, 1
      %p58 = scmp.ne.s32.totalorder %s53, %s55
      %p59 = scmp.eq.s32.totalorder %s19, 0
      %p60 = por %p58, %p59
      %p61 = scmp.ne.s32.totalorder %s53, %s55
      %p62 = scmp.eq.s32.totalorder %s24, 1
      %p63 = por %p61, %p62
      %p64 = scmp.ne.s32.totalorder %s55, %s56
      %p65 = scmp.eq.s32.totalorder %s24, 0
      %p66 = por %p64, %p65
      %p67 = scmp.ne.s32.totalorder %s55, %s56
      %p68 = scmp.eq.s32.totalorder %s25, 1
      %p69 = por %p67, %p68
      %p71 = scmp.ne.s32.totalorder %s56, %s70
      %p72 = scmp.eq.s32.totalorder %s25, 0
      %p73 = por %p71, %p72
      %s75 = sadd.s32 %s74, 1
      %p78 = scmp.eq.s32.totalorder %s19, 1
      %p79 = scmp.ne.s32.totalorder %s74, %s76
      %p80 = scmp.eq.s32.totalorder %s19, 0
      %p81 = por %p79, %p80
      %p82 = scmp.ne.s32.totalorder %s74, %s76
      %p83 = scmp.eq.s32.totalorder %s24, 1
      %p84 = por %p82, %p83
      %p85 = scmp.ne.s32.totalorder %s76, %s77
      %p86 = scmp.eq.s32.totalorder %s24, 0
      %p87 = por %p85, %p86
      %p88 = scmp.ne.s32.totalorder %s76, %s77
      %p89 = scmp.eq.s32.totalorder %s25, 1
      %p90 = por %p88, %p89
      %p92 = scmp.ne.s32.totalorder %s77, %s91
      %p93 = scmp.eq.s32.totalorder %s25, 0
      %p94 = por %p92, %p93
      %s96 = sadd.s32 %s95, 1
      %p99 = scmp.eq.s32.totalorder %s19, 1
      %p100 = scmp.ne.s32.totalorder %s95, %s97
      %p101 = scmp.eq.s32.totalorder %s19, 0
      %p102 = por %p100, %p101
      %p103 = scmp.ne.s32.totalorder %s95, %s97
      %p104 = scmp.eq.s32.totalorder %s24, 1
      %p105 = por %p103, %p104
      %p106 = scmp.ne.s32.totalorder %s97, %s98
      %p107 = scmp.eq.s32.totalorder %s24, 0
      %p108 = por %p106, %p107
      %p109 = scmp.ne.s32.totalorder %s97, %s98
      %p110 = scmp.eq.s32.totalorder %s25, 1
      %p111 = por %p109, %p110
      %p113 = scmp.ne.s32.totalorder %s98, %s112
      %p114 = scmp.eq.s32.totalorder %s25, 0
      %p115 = por %p113, %p114
      %s117 = sadd.s32 %s116, 1
      %p120 = scmp.eq.s32.totalorder %s19, 1
      %p121 = scmp.ne.s32.totalorder %s116, %s118
      %p122 = scmp.eq.s32.totalorder %s19, 0
      %p123 = por %p121, %p122
      %p124 = scmp.ne.s32.totalorder %s116, %s118
      %p125 = scmp.eq.s32.totalorder %s24, 1
      %p126 = por %p124, %p125
      %p127 = scmp.ne.s32.totalorder %s118, %s119
      %p128 = scmp.eq.s32.totalorder %s24, 0
      %p129 = por %p127, %p128
      %p130 = scmp.ne.s32.totalorder %s118, %s119
      %p131 = scmp.eq.s32.totalorder %s25, 1
      %p132 = por %p130, %p131
      %p134 = scmp.ne.s32.totalorder %s119, %s133
      %p135 = scmp.eq.s32.totalorder %s25, 0
      %p136 = por %p134, %p135
      %s138 = sadd.s32 %s137, 1
      %p141 = scmp.eq.s32.totalorder %s19, 1
      %p142 = scmp.ne.s32.totalorder %s137, %s139
      %p143 = scmp.eq.s32.totalorder %s19, 0
      %p144 = por %p142, %p143
      %p145 = scmp.ne.s32.totalorder %s137, %s139
      %p146 = scmp.eq.s32.totalorder %s24, 1
      %p147 = por %p145, %p146
      %p148 = scmp.ne.s32.totalorder %s139, %s140
      %p149 = scmp.eq.s32.totalorder %s24, 0
      %p150 = por %p148, %p149
      %p151 = scmp.ne.s32.totalorder %s139, %s140
      %p152 = scmp.eq.s32.totalorder %s25, 1
      %p153 = por %p151, %p152
      %p155 = scmp.ne.s32.totalorder %s140, %s154
      %p156 = scmp.eq.s32.totalorder %s25, 0
      %p157 = por %p155, %p156
      %s159 = sadd.s32 %s158, 1
      %p162 = scmp.eq.s32.totalorder %s19, 1
      %p163 = scmp.ne.s32.totalorder %s158, %s160
      %p164 = scmp.eq.s32.totalorder %s19, 0
      %p165 = por %p163, %p164
      %p166 = scmp.ne.s32.totalorder %s158, %s160
      %p167 = scmp.eq.s32.totalorder %s24, 1
      %p168 = por %p166, %p167
      %p169 = scmp.ne.s32.totalorder %s160, %s161
      %p170 = scmp.eq.s32.totalorder %s24, 0
      %p171 = por %p169, %p170
      %p172 = scmp.ne.s32.totalorder %s160, %s161
      %p173 = scmp.eq.s32.totalorder %s25, 1
      %p174 = por %p172, %p173
      %p176 = scmp.ne.s32.totalorder %s161, %s175
      %p177 = scmp.eq.s32.totalorder %s25, 0
      %p178 = por %p176, %p177
      %s180 = sadd.s32 %s179, 1
      %p183 = scmp.eq.s32.totalorder %s19, 1
      %p184 = scmp.ne.s32.totalorder %s179, %s181
      %p185 = scmp.eq.s32.totalorder %s19, 0
      %p186 = por %p184, %p185
      %p187 = scmp.ne.s32.totalorder %s179, %s181
      %p188 = scmp.eq.s32.totalorder %s24, 1
      %p189 = por %p187, %p188
      %p190 = scmp.ne.s32.totalorder %s181, %s182
      %p191 = scmp.eq.s32.totalorder %s24, 0
      %p192 = por %p190, %p191
      %p193 = scmp.ne.s32.totalorder %s181, %s182
      %p194 = scmp.eq.s32.totalorder %s25, 1
      %p195 = por %p193, %p194
      %p197 = scmp.ne.s32.totalorder %s182, %s196
      %p198 = scmp.eq.s32.totalorder %s25, 0
      %p199 = por %p197, %p198
      %s201 = sadd.s32 %s200, 1
      %p204 = scmp.eq.s32.totalorder %s19, 1
      %p205 = scmp.ne.s32.totalorder %s200, %s202
      %p206 = scmp.eq.s32.totalorder %s19, 0
      %p207 = por %p205, %p206
      %p208 = scmp.ne.s32.totalorder %s200, %s202
      %p209 = scmp.eq.s32.totalorder %s24, 1
      %p210 = por %p208, %p209
      %p211 = scmp.ne.s32.totalorder %s202, %s203
      %p212 = scmp.eq.s32.totalorder %s24, 0
      %p213 = por %p211, %p212
      %p214 = scmp.ne.s32.totalorder %s202, %s203
      %p215 = scmp.eq.s32.totalorder %s25, 1
      %p216 = por %p214, %p215
      %p218 = scmp.ne.s32.totalorder %s203, %s217
      %p219 = scmp.eq.s32.totalorder %s25, 0
      %p220 = por %p218, %p219
      %s222 = sadd.s32 %s221, 1
      %p225 = scmp.eq.s32.totalorder %s19, 1
      %p226 = scmp.ne.s32.totalorder %s221, %s223
      %p227 = scmp.eq.s32.totalorder %s19, 0
      %p228 = por %p226, %p227
      %p229 = scmp.ne.s32.totalorder %s221, %s223
      %p230 = scmp.eq.s32.totalorder %s24, 1
      %p231 = por %p229, %p230
      %p232 = scmp.ne.s32.totalorder %s223, %s224
      %p233 = scmp.eq.s32.totalorder %s24, 0
      %p234 = por %p232, %p233
      %p235 = scmp.ne.s32.totalorder %s223, %s224
      %p236 = scmp.eq.s32.totalorder %s25, 1
      %p237 = por %p235, %p236
      %p239 = scmp.ne.s32.totalorder %s224, %s238
      %p240 = scmp.eq.s32.totalorder %s25, 0
      %p241 = por %p239, %p240
      %s242 = ssub.s32 %s19, %s26
      %p243 = scmp.eq.s32.totalorder %s242, 0
      %s245 = sadd.s32 %s244, 1
      %s246 = scalar_select %p243, %s244, %s245
      %p249 = pneg %p243
      %p250 = scmp.eq.s32.totalorder %s19, 1
      %p251 = por %p249, %p250
      %p252 = scmp.ne.s32.totalorder %s244, %s247
      %p253 = scmp.eq.s32.totalorder %s19, 0
      %p254 = por %p252, %p253
      %p255 = scmp.ne.s32.totalorder %s244, %s247
      %p256 = scmp.eq.s32.totalorder %s24, 1
      %p257 = por %p255, %p256
      %p258 = scmp.ne.s32.totalorder %s247, %s248
      %p259 = scmp.eq.s32.totalorder %s24, 0
      %p260 = por %p258, %p259
      %p261 = scmp.ne.s32.totalorder %s247, %s248
      %p262 = scmp.eq.s32.totalorder %s25, 1
      %p263 = por %p261, %p262
      %p265 = scmp.ne.s32.totalorder %s248, %s264
      %p266 = scmp.eq.s32.totalorder %s25, 0
      %p267 = por %p265, %p266
      %p268 = scmp.le.s32.totalorder 1, %s19
      %p269 = scmp.lt.s32.totalorder %s19, 3
      %p270 = pnand %p268, %p269
      %p271 = pneg %p270
      // Predicated region
      $region9: #{rotation_invariant_gabor_cnn.1} parent=5 // pred_check
        _
      $region10: #{rotation_invariant_gabor_cnn.1} parent=5 // pred_check_branch
        %273 = sbr.rel (%p270) target = $region12
      $region11: #{rotation_invariant_gabor_cnn.1} parent=5 // pred_region
        %s274 = ssub.s32 %s19, 1
        // Predicated region
        $region13: #{rotation_invariant_gabor_cnn.1} parent=11 // pred_check
          %p275 = pneg %p66
        $region14: #{rotation_invariant_gabor_cnn.1} parent=11 // pred_check_branch
          %277 = sbr.rel (%p275) target = $region16
        $region15: #{rotation_invariant_gabor_cnn.1} parent=11 // pred_region
          _
        $region16: #{rotation_invariant_gabor_cnn.1} parent=11 // pred_fallthru
          _
        // Predicated region
        $region17: #{rotation_invariant_gabor_cnn.1} parent=11 // pred_check
          %p278 = pneg %p87
        $region18: #{rotation_invariant_gabor_cnn.1} parent=11 // pred_check_branch
          %280 = sbr.rel (%p278) target = $region20
        $region19: #{rotation_invariant_gabor_cnn.1} parent=11 // pred_region
          _
        $region20: #{rotation_invariant_gabor_cnn.1} parent=11 // pred_fallthru
          _
        // Predicated region
        $region21: #{rotation_invariant_gabor_cnn.1} parent=11 // pred_check
          %p281 = pneg %p108
        $region22: #{rotation_invariant_gabor_cnn.1} parent=11 // pred_check_branch
          %283 = sbr.rel (%p281) target = $region24
        $region23: #{rotation_invariant_gabor_cnn.1} parent=11 // pred_region
          _
        $region24: #{rotation_invariant_gabor_cnn.1} parent=11 // pred_fallthru
          _
        // Predicated region
        $region25: #{rotation_invariant_gabor_cnn.1} parent=11 // pred_check
          %p284 = pneg %p129
        $region26: #{rotation_invariant_gabor_cnn.1} parent=11 // pred_check_branch
          %286 = sbr.rel (%p284) target = $region28
        $region27: #{rotation_invariant_gabor_cnn.1} parent=11 // pred_region
          _
        $region28: #{rotation_invariant_gabor_cnn.1} parent=11 // pred_fallthru
          _
        // Predicated region
        $region29: #{rotation_invariant_gabor_cnn.1} parent=11 // pred_check
          %p287 = pneg %p150
        $region30: #{rotation_invariant_gabor_cnn.1} parent=11 // pred_check_branch
          %289 = sbr.rel (%p287) target = $region32
        $region31: #{rotation_invariant_gabor_cnn.1} parent=11 // pred_region
          _
        $region32: #{rotation_invariant_gabor_cnn.1} parent=11 // pred_fallthru
          _
        // Predicated region
        $region33: #{rotation_invariant_gabor_cnn.1} parent=11 // pred_check
          %p290 = pneg %p171
        $region34: #{rotation_invariant_gabor_cnn.1} parent=11 // pred_check_branch
          %292 = sbr.rel (%p290) target = $region36
        $region35: #{rotation_invariant_gabor_cnn.1} parent=11 // pred_region
          _
        $region36: #{rotation_invariant_gabor_cnn.1} parent=11 // pred_fallthru
          _
        // Predicated region
        $region37: #{rotation_invariant_gabor_cnn.1} parent=11 // pred_check
          %p293 = pneg %p192
        $region38: #{rotation_invariant_gabor_cnn.1} parent=11 // pred_check_branch
          %295 = sbr.rel (%p293) target = $region40
        $region39: #{rotation_invariant_gabor_cnn.1} parent=11 // pred_region
          _
        $region40: #{rotation_invariant_gabor_cnn.1} parent=11 // pred_fallthru
          _
        // Predicated region
        $region41: #{rotation_invariant_gabor_cnn.1} parent=11 // pred_check
          %p296 = pneg %p213
        $region42: #{rotation_invariant_gabor_cnn.1} parent=11 // pred_check_branch
          %298 = sbr.rel (%p296) target = $region44
        $region43: #{rotation_invariant_gabor_cnn.1} parent=11 // pred_region
          _
        $region44: #{rotation_invariant_gabor_cnn.1} parent=11 // pred_fallthru
          _
        // Predicated region
        $region45: #{rotation_invariant_gabor_cnn.1} parent=11 // pred_check
          %p299 = pneg %p234
        $region46: #{rotation_invariant_gabor_cnn.1} parent=11 // pred_check_branch
          %301 = sbr.rel (%p299) target = $region48
        $region47: #{rotation_invariant_gabor_cnn.1} parent=11 // pred_region
          _
        $region48: #{rotation_invariant_gabor_cnn.1} parent=11 // pred_fallthru
          _
      $region12: #{rotation_invariant_gabor_cnn.1} parent=5 // pred_fallthru
        _
      %p302 = scmp.lt.s32.totalorder %s19, 2
      // Predicated region
      $region49: #{rotation_invariant_gabor_cnn.1} parent=5 // pred_check
        %p303 = pneg %p302
      $region50: #{rotation_invariant_gabor_cnn.1} parent=5 // pred_check_branch
        %305 = sbr.rel (%p303) target = $region52
      $region51: #{rotation_invariant_gabor_cnn.1} parent=5 // pred_region
        // Predicated region
        $region53: #{rotation_invariant_gabor_cnn.1} parent=51 // pred_check
          %p306 = pneg %p39
        $region54: #{rotation_invariant_gabor_cnn.1} parent=51 // pred_check_branch
          %308 = sbr.rel (%p306) target = $region56
        $region55: #{rotation_invariant_gabor_cnn.1} parent=51 // pred_region
          %p309 = scmp.lt.s32.totalorder %s19, 1
          %s310 = scalar_select %p309, %s19, 1
          %s311 = smul.addr %s310, 24
          %s312 = smul.addr %s311, 4
          %s313 = scalar_lea.vmem %s0, %s312
        $region56: #{rotation_invariant_gabor_cnn.1} parent=51 // pred_fallthru
          _
      $region52: #{rotation_invariant_gabor_cnn.1} parent=5 // pred_fallthru
        _
      %p314 = scmp.le.s32.totalorder 1, %s19
      %p315 = scmp.lt.s32.totalorder %s19, 3
      %p316 = pnand %p314, %p315
      %p317 = pneg %p316
      // Predicated region
      $region57: #{rotation_invariant_gabor_cnn.1} parent=5 // pred_check
        _
      $region58: #{rotation_invariant_gabor_cnn.1} parent=5 // pred_check_branch
        %319 = sbr.rel (%p316) target = $region60
      $region59: #{rotation_invariant_gabor_cnn.1} parent=5 // pred_region
        %s320 = ssub.s32 %s19, 1
        %p321 = scmp.lt.s32.totalorder %s24, 1
        %s322 = scalar_select %p321, %s24, 1
        %s323 = smul.addr %s322, 24
        %s324 = smul.addr %s323, 4
        %s325 = scalar_lea.vmem %s0, %s324
        %p326 = pneg %p45
        %p327 = pneg %p42
        %p328 = pneg %p66
        %p329 = pneg %p63
        %p330 = pneg %p87
        %p331 = pneg %p84
        %p332 = pneg %p108
        %p333 = pneg %p105
        %p334 = pneg %p129
        %p335 = pneg %p126
        %p336 = pneg %p150
        %p337 = pneg %p147
        %p338 = pneg %p171
        %p339 = pneg %p168
        %p340 = pneg %p192
        %p341 = pneg %p189
        %p342 = pneg %p213
        %p343 = pneg %p210
        %p344 = pneg %p234
        %p345 = pneg %p231
        %p346 = pneg %p260
        %p347 = pneg %p257
        %s348 = sand.u32 %s247, 1
        %s349 = scalar_lea.sflag [#allocation3], %s348
        %s350 = sand.u32 %s247, 1
        %s351 = scalar_lea.vmem [#allocation2], %s350
        %p352 = scmp.lt.s32.totalorder %s24, 1
        %s353 = scalar_select %p352, %s24, 1
        %s354 = smul.addr %s353, 24
        %s355 = smul.addr %s354, 4
        %s356 = scalar_lea.vmem %s0, %s355
        %v358 = vld [vmem:[%s356] sm:$0xff]
        %v359 = vld [vmem:[%s356 + $0x8] sm:$0xff]
        %v360 = vld [vmem:[%s356 + $0x10] sm:$0xff]
        %v361 = vld [vmem:[%s356 + $0x18] sm:$0xff]
        %v362 = vld [vmem:[%s356 + $0x20] sm:$0xff]
        %v363 = vld [vmem:[%s356 + $0x28] sm:$0xff]
        %v364 = vld [vmem:[%s356 + $0x30] sm:$0xff]
        %v365 = vld [vmem:[%s356 + $0x38] sm:$0xff]
        %v366 = vld [vmem:[%s356 + $0x40] sm:$0xff]
        %v367 = vld [vmem:[%s356 + $0x48] sm:$0xff]
        %v368 = vld [vmem:[%s356 + $0x50] sm:$0xff]
        %v369 = vld [vmem:[%s356 + $0x58] sm:$0xff]
        %v370 = vld [vmem:[%s1] sm:$0xff]
        %v371 = vld [vmem:[%s1 + $0x8] sm:$0xff]
        %v372 = vld [vmem:[%s1 + $0x10] sm:$0xff]
        %v373 = vld [vmem:[%s1 + $0x18] sm:$0xff]
        %v374 = vld [vmem:[%s1 + $0x20] sm:$0xff]
        %v375 = vld [vmem:[%s1 + $0x28] sm:$0xff]
        %v376 = vld [vmem:[%s1 + $0x30] sm:$0xff]
        %v377 = vld [vmem:[%s1 + $0x38] sm:$0xff]
        %v378 = vld [vmem:[%s1 + $0x40] sm:$0xff]
        %v379 = vld [vmem:[%s1 + $0x48] sm:$0xff]
        %v380 = vld [vmem:[%s1 + $0x50] sm:$0xff]
        %v381 = vld [vmem:[%s1 + $0x58] sm:$0xff]
        %v382 = vld [vmem:[%s1 + $0x60] sm:$0xff]
        %v383 = vld [vmem:[%s1 + $0x68] sm:$0xff]
        %v384 = vld [vmem:[%s1 + $0x70] sm:$0xff]
        %v385 = vld [vmem:[%s1 + $0x78] sm:$0xff]
        %v386 = vld [vmem:[%s1 + $0x80] sm:$0xff]
        %v387 = vld [vmem:[%s1 + $0x88] sm:$0xff]
        %v388 = vld [vmem:[%s1 + $0x90] sm:$0xff]
        %v389 = vld [vmem:[%s1 + $0x98] sm:$0xff]
        %v390 = vld [vmem:[%s1 + $0xa0] sm:$0xff]
        %v391 = vld [vmem:[%s1 + $0xa8] sm:$0xff]
        %v392 = vld [vmem:[%s1 + $0xb0] sm:$0xff]
        %v393 = vld [vmem:[%s1 + $0xb8] sm:$0xff]
        %v394 = vld [vmem:[%s1 + $0xc0] sm:$0x33]
        %v401 = vunpack.c.l.b16 %v358
        %v402 = vunpack.c.h.b16 %v358
        %v403 = vunpack.c.l.b16 %v359
        %v404 = vunpack.c.h.b16 %v359
        %v405 = vunpack.c.l.b16 %v360
        %v406 = vunpack.c.h.b16 %v360
        %v407 = vunpack.c.l.b16 %v361
        %v408 = vunpack.c.h.b16 %v361
        %v409 = vunpack.c.l.b16 %v362
        %v410 = vunpack.c.h.b16 %v362
        %v411 = vunpack.c.l.b16 %v363
        %v412 = vunpack.c.h.b16 %v363
        %v413 = vpack.c.b16 %v403, %v401
        %v414 = vpack.c.b16 %v404, %v402
        %v415 = vpack.c.b16 %v407, %v405
        %v416 = vpack.c.b16 %v408, %v406
        %v417 = vpack.c.b16 %v411, %v409
        %v418 = vpack.c.b16 %v412, %v410
        %v447 = vunpack.c.l.b16 %v370
        %v448 = vunpack.c.h.b16 %v370
        %v449 = vunpack.c.l.b16 %v371
        %v450 = vunpack.c.h.b16 %v371
        %v451 = vunpack.c.l.b16 %v372
        %v452 = vunpack.c.h.b16 %v372
        %v453 = vunpack.c.l.b16 %v373
        %v454 = vunpack.c.h.b16 %v373
        %v455 = vunpack.c.l.b16 %v374
        %v456 = vunpack.c.h.b16 %v374
        %v457 = vunpack.c.l.b16 %v375
        %v458 = vunpack.c.h.b16 %v375
        %v459 = vunpack.c.l.b16 %v376
        %v460 = vunpack.c.h.b16 %v376
        %v461 = vunpack.c.l.b16 %v377
        %v462 = vunpack.c.h.b16 %v377
        %v463 = vunpack.c.l.b16 %v378
        %v464 = vunpack.c.h.b16 %v378
        %v465 = vunpack.c.l.b16 %v379
        %v466 = vunpack.c.h.b16 %v379
        %v467 = vunpack.c.l.b16 %v380
        %v468 = vunpack.c.h.b16 %v380
        %v469 = vunpack.c.l.b16 %v381
        %v470 = vunpack.c.h.b16 %v381
        %v471 = vunpack.c.l.b16 %v382
        %v472 = vunpack.c.h.b16 %v382
        %v473 = vunpack.c.l.b16 %v383
        %v474 = vunpack.c.h.b16 %v383
        %v475 = vunpack.c.l.b16 %v384
        %v476 = vunpack.c.h.b16 %v384
        %v477 = vunpack.c.l.b16 %v385
        %v478 = vunpack.c.h.b16 %v385
        %v479 = vunpack.c.l.b16 %v386
        %v480 = vunpack.c.h.b16 %v386
        %v481 = vunpack.c.l.b16 %v387
        %v482 = vunpack.c.h.b16 %v387
        %v483 = vunpack.c.l.b16 %v388
        %v484 = vunpack.c.h.b16 %v388
        %v485 = vunpack.c.l.b16 %v389
        %v486 = vunpack.c.h.b16 %v389
        %v487 = vunpack.c.l.b16 %v390
        %v488 = vunpack.c.h.b16 %v390
        %v489 = vunpack.c.l.b16 %v391
        %v490 = vunpack.c.h.b16 %v391
        %v491 = vunpack.c.l.b16 %v392
        %v492 = vunpack.c.h.b16 %v392
        %v493 = vunpack.c.l.b16 %v393
        %v494 = vunpack.c.h.b16 %v393
        %v495 = vunpack.c.l.b16 %v394
        %v496 = vunpack.c.h.b16 %v394
        %v497 = vpack.c.b16 %v449, %v447
        %v498 = vpack.c.b16 %v450, %v448
        %v499 = vpack.c.b16 %v453, %v451
        %v500 = vpack.c.b16 %v454, %v452
        %v501 = vpack.c.b16 %v457, %v455
        %v502 = vpack.c.b16 %v458, %v456
        %v503 = vpack.c.b16 %v461, %v459
        %v504 = vpack.c.b16 %v462, %v460
        %v505 = vpack.c.b16 %v465, %v463
        %v506 = vpack.c.b16 %v466, %v464
        %v507 = vpack.c.b16 %v469, %v467
        %v508 = vpack.c.b16 %v470, %v468
        %v509 = vpack.c.b16 %v473, %v471
        %v510 = vpack.c.b16 %v474, %v472
        %v511 = vpack.c.b16 %v477, %v475
        %v512 = vpack.c.b16 %v478, %v476
        %v513 = vpack.c.b16 %v481, %v479
        %v514 = vpack.c.b16 %v482, %v480
        %v515 = vpack.c.b16 %v485, %v483
        %v516 = vpack.c.b16 %v486, %v484
        %v517 = vpack.c.b16 %v489, %v487
        %v518 = vpack.c.b16 %v490, %v488
        %v519 = vpack.c.b16 %v493, %v491
        %v520 = vpack.c.b16 %v494, %v492
        %v521 = vpack.c.b16 %v495, %v495
        %v522 = vpack.c.b16 %v496, %v496
        %vm547 = vcmask 556032
        %v549 = vsel %vm547, %v414, 0
        %v552 = vsel %vm547, %v416, 0
        %v555 = vsel %vm547, %v418, 0
        %vm557 = vcmask 1041408
        %v559 = vsel %vm557, %v521, 0
        %v562 = vsel %vm557, %v522, 0
        %564 = vmatprep.subr.bf16.mxu0 %v498
        %565 = vmatpush1.bf16.msra.mxu0 %v497
        %566 = vmatprep.subr.bf16.mxu0 %v500
        %567 = vmatpush1.bf16.msra.mxu0 %v499
        %568 = vmatprep.subr.bf16.mxu0 %v502
        %569 = vmatpush1.bf16.msra.mxu0 %v501
        %570 = vmatprep.subr.bf16.mxu0 %v504
        %571 = vmatpush1.bf16.msra.mxu0 %v503
        %572 = vmatprep.subr.bf16.mxu0 %v506
        %573 = vmatpush1.bf16.msra.mxu0 %v505
        %574 = vmatprep.subr.bf16.mxu0 %v508
        %575 = vmatpush1.bf16.msra.mxu0 %v507
        %576 = vmatprep.subr.bf16.mxu0 %v510
        %577 = vmatpush1.bf16.msra.mxu0 %v509
        %578 = vmatprep.subr.bf16.mxu0 %v512
        %579 = vmatpush1.bf16.msra.mxu0 %v511
        %580 = vmatprep.subr.bf16.mxu0 %v514
        %581 = vmatpush1.bf16.msra.mxu0 %v513
        %582 = vmatprep.subr.bf16.mxu0 %v516
        %583 = vmatpush1.bf16.msra.mxu0 %v515
        %584 = vmatprep.subr.bf16.mxu0 %v518
        %585 = vmatpush1.bf16.msra.mxu0 %v517
        %586 = vmatprep.subr.bf16.mxu0 %v520
        %587 = vmatpush1.bf16.msra.mxu0 %v519
        %588 = vmatprep.subr.bf16.mxu0 %v562
        %589 = vmatpush1.bf16.msra.mxu0 %v559
        %590 = vmatprep.subr.bf16.mxu0 0
        %591 = vmatpush1.bf16.msra.mxu0 0
        %592 = vmatprep.subr.bf16.mxu0 0
        %593 = vmatpush1.bf16.msra.mxu0 0
        %594 = vmatprep.subr.bf16.mxu0 0
        %595 = vmatpush1.bf16.msra.mxu0 0
        %596 = vmatprep.mubr.bf16.mxu0 %v549
        %597 = vmatmul.mubr.bf16.gmra.mrb[0].mxu0 %v413
        %v598 = vpop.f32.mrb[0].mxu0
        %v599 = vadd.f32 0.0, %v598
        %v600 = vpop.f32.mrb[0].mxu0
        %v601 = vadd.f32 0.0, %v600
        %v602 = vpop.f32.mrb[0].mxu0
        %v603 = vadd.f32 0.0, %v602
        %v604 = vpop.f32.mrb[0].mxu0
        %v605 = vadd.f32 0.0, %v604
        %606 = vmatprep.mubr.bf16.mxu0 %v552
        %607 = vmatmul.mubr.bf16.gmra.mrb[0].mxu0 %v415
        %v608 = vpop.f32.mrb[0].mxu0
        %v609 = vadd.f32 0.0, %v608
        %v610 = vpop.f32.mrb[0].mxu0
        %v611 = vadd.f32 0.0, %v610
        %v612 = vpop.f32.mrb[0].mxu0
        %v613 = vadd.f32 0.0, %v612
        %v614 = vpop.f32.mrb[0].mxu0
        %v615 = vadd.f32 0.0, %v614
        %616 = vmatprep.mubr.bf16.mxu0 %v555
        %617 = vmatmul.mubr.bf16.gmra.mrb[0].mxu0 %v417
        %v618 = vpop.f32.mrb[0].mxu0
        %v619 = vadd.f32 0.0, %v618
        %v620 = vpop.f32.mrb[0].mxu0
        %v621 = vadd.f32 0.0, %v620
        %v622 = vpop.f32.mrb[0].mxu0
        %v623 = vadd.f32 0.0, %v622
        %v624 = vpop.f32.mrb[0].mxu0
        %v625 = vadd.f32 0.0, %v624
        %626 = vdwg.mxu0
        %v627 = vld [vmem:[%s2] sm:$0xff]
        %v628 = vld [vmem:[%s2 + $0x8] sm:$0xff]
        %v629 = vld [vmem:[%s2 + $0x10] sm:$0xff]
        %v630 = vld [vmem:[%s2 + $0x18] sm:$0xff]
        %v631 = vld [vmem:[%s2 + $0x20] sm:$0xff]
        %v632 = vld [vmem:[%s2 + $0x28] sm:$0xff]
        %v633 = vld [vmem:[%s2 + $0x30] sm:$0xff]
        %v634 = vld [vmem:[%s2 + $0x38] sm:$0xff]
        %v635 = vld [vmem:[%s2 + $0x40] sm:$0xff]
        %v636 = vld [vmem:[%s2 + $0x48] sm:$0xff]
        %v637 = vld [vmem:[%s2 + $0x50] sm:$0xff]
        %v638 = vld [vmem:[%s2 + $0x58] sm:$0xff]
        %v639 = vld [vmem:[%s2 + $0x60] sm:$0xff]
        %v640 = vld [vmem:[%s2 + $0x68] sm:$0xff]
        %v641 = vld [vmem:[%s2 + $0x70] sm:$0xff]
        %v642 = vld [vmem:[%s2 + $0x78] sm:$0xff]
        %v643 = vld [vmem:[%s2 + $0x80] sm:$0xff]
        %v644 = vld [vmem:[%s2 + $0x88] sm:$0xff]
        %v645 = vld [vmem:[%s2 + $0x90] sm:$0xff]
        %v646 = vld [vmem:[%s2 + $0x98] sm:$0xff]
        %v647 = vld [vmem:[%s2 + $0xa0] sm:$0xff]
        %v648 = vld [vmem:[%s2 + $0xa8] sm:$0xff]
        %v649 = vld [vmem:[%s2 + $0xb0] sm:$0xff]
        %v650 = vld [vmem:[%s2 + $0xb8] sm:$0xff]
        %v651 = vld [vmem:[%s2 + $0xc0] sm:$0x33]
        %v677 = vunpack.c.l.b16 %v627
        %v678 = vunpack.c.h.b16 %v627
        %v679 = vunpack.c.l.b16 %v628
        %v680 = vunpack.c.h.b16 %v628
        %v681 = vunpack.c.l.b16 %v629
        %v682 = vunpack.c.h.b16 %v629
        %v683 = vunpack.c.l.b16 %v630
        %v684 = vunpack.c.h.b16 %v630
        %v685 = vunpack.c.l.b16 %v631
        %v686 = vunpack.c.h.b16 %v631
        %v687 = vunpack.c.l.b16 %v632
        %v688 = vunpack.c.h.b16 %v632
        %v689 = vunpack.c.l.b16 %v633
        %v690 = vunpack.c.h.b16 %v633
        %v691 = vunpack.c.l.b16 %v634
        %v692 = vunpack.c.h.b16 %v634
        %v693 = vunpack.c.l.b16 %v635
        %v694 = vunpack.c.h.b16 %v635
        %v695 = vunpack.c.l.b16 %v636
        %v696 = vunpack.c.h.b16 %v636
        %v697 = vunpack.c.l.b16 %v637
        %v698 = vunpack.c.h.b16 %v637
        %v699 = vunpack.c.l.b16 %v638
        %v700 = vunpack.c.h.b16 %v638
        %v701 = vunpack.c.l.b16 %v639
        %v702 = vunpack.c.h.b16 %v639
        %v703 = vunpack.c.l.b16 %v640
        %v704 = vunpack.c.h.b16 %v640
        %v705 = vunpack.c.l.b16 %v641
        %v706 = vunpack.c.h.b16 %v641
        %v707 = vunpack.c.l.b16 %v642
        %v708 = vunpack.c.h.b16 %v642
        %v709 = vunpack.c.l.b16 %v643
        %v710 = vunpack.c.h.b16 %v643
        %v711 = vunpack.c.l.b16 %v644
        %v712 = vunpack.c.h.b16 %v644
        %v713 = vunpack.c.l.b16 %v645
        %v714 = vunpack.c.h.b16 %v645
        %v715 = vunpack.c.l.b16 %v646
        %v716 = vunpack.c.h.b16 %v646
        %v717 = vunpack.c.l.b16 %v647
        %v718 = vunpack.c.h.b16 %v647
        %v719 = vunpack.c.l.b16 %v648
        %v720 = vunpack.c.h.b16 %v648
        %v721 = vunpack.c.l.b16 %v649
        %v722 = vunpack.c.h.b16 %v649
        %v723 = vunpack.c.l.b16 %v650
        %v724 = vunpack.c.h.b16 %v650
        %v725 = vunpack.c.l.b16 %v651
        %v726 = vunpack.c.h.b16 %v651
        %v727 = vpack.c.b16 %v679, %v677
        %v728 = vpack.c.b16 %v680, %v678
        %v729 = vpack.c.b16 %v683, %v681
        %v730 = vpack.c.b16 %v684, %v682
        %v731 = vpack.c.b16 %v687, %v685
        %v732 = vpack.c.b16 %v688, %v686
        %v733 = vpack.c.b16 %v691, %v689
        %v734 = vpack.c.b16 %v692, %v690
        %v735 = vpack.c.b16 %v695, %v693
        %v736 = vpack.c.b16 %v696, %v694
        %v737 = vpack.c.b16 %v699, %v697
        %v738 = vpack.c.b16 %v700, %v698
        %v739 = vpack.c.b16 %v703, %v701
        %v740 = vpack.c.b16 %v704, %v702
        %v741 = vpack.c.b16 %v707, %v705
        %v742 = vpack.c.b16 %v708, %v706
        %v743 = vpack.c.b16 %v711, %v709
        %v744 = vpack.c.b16 %v712, %v710
        %v745 = vpack.c.b16 %v715, %v713
        %v746 = vpack.c.b16 %v716, %v714
        %v747 = vpack.c.b16 %v719, %v717
        %v748 = vpack.c.b16 %v720, %v718
        %v749 = vpack.c.b16 %v723, %v721
        %v750 = vpack.c.b16 %v724, %v722
        %v751 = vpack.c.b16 %v725, %v725
        %v752 = vpack.c.b16 %v726, %v726
        %v778 = vsel %vm557, %v751, 0
        %v781 = vsel %vm557, %v752, 0
        %783 = vmatprep.subr.bf16.mxu0 %v728
        %784 = vmatpush1.bf16.msra.mxu0 %v727
        %785 = vmatprep.subr.bf16.mxu0 %v730
        %786 = vmatpush1.bf16.msra.mxu0 %v729
        %787 = vmatprep.subr.bf16.mxu0 %v732
        %788 = vmatpush1.bf16.msra.mxu0 %v731
        %789 = vmatprep.subr.bf16.mxu0 %v734
        %790 = vmatpush1.bf16.msra.mxu0 %v733
        %791 = vmatprep.subr.bf16.mxu0 %v736
        %792 = vmatpush1.bf16.msra.mxu0 %v735
        %793 = vmatprep.subr.bf16.mxu0 %v738
        %794 = vmatpush1.bf16.msra.mxu0 %v737
        %795 = vmatprep.subr.bf16.mxu0 %v740
        %796 = vmatpush1.bf16.msra.mxu0 %v739
        %797 = vmatprep.subr.bf16.mxu0 %v742
        %798 = vmatpush1.bf16.msra.mxu0 %v741
        %799 = vmatprep.subr.bf16.mxu0 %v744
        %800 = vmatpush1.bf16.msra.mxu0 %v743
        %801 = vmatprep.subr.bf16.mxu0 %v746
        %802 = vmatpush1.bf16.msra.mxu0 %v745
        %803 = vmatprep.subr.bf16.mxu0 %v748
        %804 = vmatpush1.bf16.msra.mxu0 %v747
        %805 = vmatprep.subr.bf16.mxu0 %v750
        %806 = vmatpush1.bf16.msra.mxu0 %v749
        %807 = vmatprep.subr.bf16.mxu0 %v781
        %808 = vmatpush1.bf16.msra.mxu0 %v778
        %809 = vmatprep.subr.bf16.mxu0 0
        %810 = vmatpush1.bf16.msra.mxu0 0
        %811 = vmatprep.subr.bf16.mxu0 0
        %812 = vmatpush1.bf16.msra.mxu0 0
        %813 = vmatprep.subr.bf16.mxu0 0
        %814 = vmatpush1.bf16.msra.mxu0 0
        %815 = vmatprep.mubr.bf16.mxu0 %v549
        %816 = vmatmul.mubr.bf16.gmra.mrb[0].mxu0 %v413
        %v817 = vpop.f32.mrb[0].mxu0
        %v818 = vadd.f32 0.0, %v817
        %v819 = vpop.f32.mrb[0].mxu0
        %v820 = vadd.f32 0.0, %v819
        %v821 = vpop.f32.mrb[0].mxu0
        %v822 = vadd.f32 0.0, %v821
        %v823 = vpop.f32.mrb[0].mxu0
        %v824 = vadd.f32 0.0, %v823
        %825 = vmatprep.mubr.bf16.mxu0 %v552
        %826 = vmatmul.mubr.bf16.gmra.mrb[0].mxu0 %v415
        %v827 = vpop.f32.mrb[0].mxu0
        %v828 = vadd.f32 0.0, %v827
        %v829 = vpop.f32.mrb[0].mxu0
        %v830 = vadd.f32 0.0, %v829
        %v831 = vpop.f32.mrb[0].mxu0
        %v832 = vadd.f32 0.0, %v831
        %v833 = vpop.f32.mrb[0].mxu0
        %v834 = vadd.f32 0.0, %v833
        %835 = vmatprep.mubr.bf16.mxu0 %v555
        %836 = vmatmul.mubr.bf16.gmra.mrb[0].mxu0 %v417
        %v837 = vpop.f32.mrb[0].mxu0
        %v838 = vadd.f32 0.0, %v837
        %v839 = vpop.f32.mrb[0].mxu0
        %v840 = vadd.f32 0.0, %v839
        %v841 = vpop.f32.mrb[0].mxu0
        %v842 = vadd.f32 0.0, %v841
        %v843 = vpop.f32.mrb[0].mxu0
        %v844 = vadd.f32 0.0, %v843
        %845 = vdwg.mxu0
        %v846 = vmax.f32 %v599, %v818
        %v847 = vmax.f32 %v601, %v820
        %v848 = vmax.f32 %v603, %v822
        %v849 = vmax.f32 %v605, %v824
        %v850 = vmax.f32 %v609, %v828
        %v851 = vmax.f32 %v611, %v830
        %v852 = vmax.f32 %v613, %v832
        %v853 = vmax.f32 %v615, %v834
        %v854 = vmax.f32 %v619, %v838
        %v855 = vmax.f32 %v621, %v840
        %v856 = vmax.f32 %v623, %v842
        %v857 = vmax.f32 %v625, %v844
        %v864 = vunpack.c.l.b16 %v364
        %v865 = vunpack.c.h.b16 %v364
        %v866 = vunpack.c.l.b16 %v365
        %v867 = vunpack.c.h.b16 %v365
        %v868 = vunpack.c.l.b16 %v366
        %v869 = vunpack.c.h.b16 %v366
        %v870 = vunpack.c.l.b16 %v367
        %v871 = vunpack.c.h.b16 %v367
        %v872 = vunpack.c.l.b16 %v368
        %v873 = vunpack.c.h.b16 %v368
        %v874 = vunpack.c.l.b16 %v369
        %v875 = vunpack.c.h.b16 %v369
        %v876 = vpack.c.b16 %v866, %v864
        %v877 = vpack.c.b16 %v867, %v865
        %v878 = vpack.c.b16 %v870, %v868
        %v879 = vpack.c.b16 %v871, %v869
        %v880 = vpack.c.b16 %v874, %v872
        %v881 = vpack.c.b16 %v875, %v873
        %v886 = vsel %vm547, %v877, 0
        %v889 = vsel %vm547, %v879, 0
        %v892 = vsel %vm547, %v881, 0
        %894 = vmatprep.subr.bf16.mxu0 %v498
        %895 = vmatpush1.bf16.msra.mxu0 %v497
        %896 = vmatprep.subr.bf16.mxu0 %v500
        %897 = vmatpush1.bf16.msra.mxu0 %v499
        %898 = vmatprep.subr.bf16.mxu0 %v502
        %899 = vmatpush1.bf16.msra.mxu0 %v501
        %900 = vmatprep.subr.bf16.mxu0 %v504
        %901 = vmatpush1.bf16.msra.mxu0 %v503
        %902 = vmatprep.subr.bf16.mxu0 %v506
        %903 = vmatpush1.bf16.msra.mxu0 %v505
        %904 = vmatprep.subr.bf16.mxu0 %v508
        %905 = vmatpush1.bf16.msra.mxu0 %v507
        %906 = vmatprep.subr.bf16.mxu0 %v510
        %907 = vmatpush1.bf16.msra.mxu0 %v509
        %908 = vmatprep.subr.bf16.mxu0 %v512
        %909 = vmatpush1.bf16.msra.mxu0 %v511
        %910 = vmatprep.subr.bf16.mxu0 %v514
        %911 = vmatpush1.bf16.msra.mxu0 %v513
        %912 = vmatprep.subr.bf16.mxu0 %v516
        %913 = vmatpush1.bf16.msra.mxu0 %v515
        %914 = vmatprep.subr.bf16.mxu0 %v518
        %915 = vmatpush1.bf16.msra.mxu0 %v517
        %916 = vmatprep.subr.bf16.mxu0 %v520
        %917 = vmatpush1.bf16.msra.mxu0 %v519
        %918 = vmatprep.subr.bf16.mxu0 %v562
        %919 = vmatpush1.bf16.msra.mxu0 %v559
        %920 = vmatprep.subr.bf16.mxu0 0
        %921 = vmatpush1.bf16.msra.mxu0 0
        %922 = vmatprep.subr.bf16.mxu0 0
        %923 = vmatpush1.bf16.msra.mxu0 0
        %924 = vmatprep.subr.bf16.mxu0 0
        %925 = vmatpush1.bf16.msra.mxu0 0
        %926 = vmatprep.mubr.bf16.mxu0 %v886
        %927 = vmatmul.mubr.bf16.gmra.mrb[0].mxu0 %v876
        %v928 = vpop.f32.mrb[0].mxu0
        %v929 = vadd.f32 0.0, %v928
        %v930 = vpop.f32.mrb[0].mxu0
        %v931 = vadd.f32 0.0, %v930
        %v932 = vpop.f32.mrb[0].mxu0
        %v933 = vadd.f32 0.0, %v932
        %v934 = vpop.f32.mrb[0].mxu0
        %v935 = vadd.f32 0.0, %v934
        %936 = vmatprep.mubr.bf16.mxu0 %v889
        %937 = vmatmul.mubr.bf16.gmra.mrb[0].mxu0 %v878
        %v938 = vpop.f32.mrb[0].mxu0
        %v939 = vadd.f32 0.0, %v938
        %v940 = vpop.f32.mrb[0].mxu0
        %v941 = vadd.f32 0.0, %v940
        %v942 = vpop.f32.mrb[0].mxu0
        %v943 = vadd.f32 0.0, %v942
        %v944 = vpop.f32.mrb[0].mxu0
        %v945 = vadd.f32 0.0, %v944
        %946 = vmatprep.mubr.bf16.mxu0 %v892
        %947 = vmatmul.mubr.bf16.gmra.mrb[0].mxu0 %v880
        %v948 = vpop.f32.mrb[0].mxu0
        %v949 = vadd.f32 0.0, %v948
        %v950 = vpop.f32.mrb[0].mxu0
        %v951 = vadd.f32 0.0, %v950
        %v952 = vpop.f32.mrb[0].mxu0
        %v953 = vadd.f32 0.0, %v952
        %v954 = vpop.f32.mrb[0].mxu0
        %v955 = vadd.f32 0.0, %v954
        %956 = vdwg.mxu0
        %v957 = vmax.f32 %v846, %v929
        %v958 = vmax.f32 %v847, %v931
        %v959 = vmax.f32 %v848, %v933
        %v960 = vmax.f32 %v849, %v935
        %v961 = vmax.f32 %v850, %v939
        %v962 = vmax.f32 %v851, %v941
        %v963 = vmax.f32 %v852, %v943
        %v964 = vmax.f32 %v853, %v945
        %v965 = vmax.f32 %v854, %v949
        %v966 = vmax.f32 %v855, %v951
        %v967 = vmax.f32 %v856, %v953
        %v968 = vmax.f32 %v857, %v955
        %969 = vmatprep.subr.bf16.mxu0 %v728
        %970 = vmatpush1.bf16.msra.mxu0 %v727
        %971 = vmatprep.subr.bf16.mxu0 %v730
        %972 = vmatpush1.bf16.msra.mxu0 %v729
        %973 = vmatprep.subr.bf16.mxu0 %v732
        %974 = vmatpush1.bf16.msra.mxu0 %v731
        %975 = vmatprep.subr.bf16.mxu0 %v734
        %976 = vmatpush1.bf16.msra.mxu0 %v733
        %977 = vmatprep.subr.bf16.mxu0 %v736
        %978 = vmatpush1.bf16.msra.mxu0 %v735
        %979 = vmatprep.subr.bf16.mxu0 %v738
        %980 = vmatpush1.bf16.msra.mxu0 %v737
        %981 = vmatprep.subr.bf16.mxu0 %v740
        %982 = vmatpush1.bf16.msra.mxu0 %v739
        %983 = vmatprep.subr.bf16.mxu0 %v742
        %984 = vmatpush1.bf16.msra.mxu0 %v741
        %985 = vmatprep.subr.bf16.mxu0 %v744
        %986 = vmatpush1.bf16.msra.mxu0 %v743
        %987 = vmatprep.subr.bf16.mxu0 %v746
        %988 = vmatpush1.bf16.msra.mxu0 %v745
        %989 = vmatprep.subr.bf16.mxu0 %v748
        %990 = vmatpush1.bf16.msra.mxu0 %v747
        %991 = vmatprep.subr.bf16.mxu0 %v750
        %992 = vmatpush1.bf16.msra.mxu0 %v749
        %993 = vmatprep.subr.bf16.mxu0 %v781
        %994 = vmatpush1.bf16.msra.mxu0 %v778
        %995 = vmatprep.subr.bf16.mxu0 0
        %996 = vmatpush1.bf16.msra.mxu0 0
        %997 = vmatprep.subr.bf16.mxu0 0
        %998 = vmatpush1.bf16.msra.mxu0 0
        %999 = vmatprep.subr.bf16.mxu0 0
        %1000 = vmatpush1.bf16.msra.mxu0 0
        %1001 = vmatprep.mubr.bf16.mxu0 %v886
        %1002 = vmatmul.mubr.bf16.gmra.mrb[0].mxu0 %v876
        %v1003 = vpop.f32.mrb[0].mxu0
        %v1004 = vadd.f32 0.0, %v1003
        %v1005 = vpop.f32.mrb[0].mxu0
        %v1006 = vadd.f32 0.0, %v1005
        %v1007 = vpop.f32.mrb[0].mxu0
        %v1008 = vadd.f32 0.0, %v1007
        %v1009 = vpop.f32.mrb[0].mxu0
        %v1010 = vadd.f32 0.0, %v1009
        %1011 = vmatprep.mubr.bf16.mxu0 %v889
        %1012 = vmatmul.mubr.bf16.gmra.mrb[0].mxu0 %v878
        %v1013 = vpop.f32.mrb[0].mxu0
        %v1014 = vadd.f32 0.0, %v1013
        %v1015 = vpop.f32.mrb[0].mxu0
        %v1016 = vadd.f32 0.0, %v1015
        %v1017 = vpop.f32.mrb[0].mxu0
        %v1018 = vadd.f32 0.0, %v1017
        %v1019 = vpop.f32.mrb[0].mxu0
        %v1020 = vadd.f32 0.0, %v1019
        %1021 = vmatprep.mubr.bf16.mxu0 %v892
        %1022 = vmatmul.mubr.bf16.gmra.mrb[0].mxu0 %v880
        %v1023 = vpop.f32.mrb[0].mxu0
        %v1024 = vadd.f32 0.0, %v1023
        %v1025 = vpop.f32.mrb[0].mxu0
        %v1026 = vadd.f32 0.0, %v1025
        %v1027 = vpop.f32.mrb[0].mxu0
        %v1028 = vadd.f32 0.0, %v1027
        %v1029 = vpop.f32.mrb[0].mxu0
        %v1030 = vadd.f32 0.0, %v1029
        %1031 = vdwg.mxu0
        %v1032 = vmax.f32 %v957, %v1004
        %v1033 = vmax.f32 %v958, %v1006
        %v1034 = vmax.f32 %v959, %v1008
        %v1035 = vmax.f32 %v960, %v1010
        %v1036 = vmax.f32 %v961, %v1014
        %v1037 = vmax.f32 %v962, %v1016
        %v1038 = vmax.f32 %v963, %v1018
        %v1039 = vmax.f32 %v964, %v1020
        %v1040 = vmax.f32 %v965, %v1024
        %v1041 = vmax.f32 %v966, %v1026
        %v1042 = vmax.f32 %v967, %v1028
        %v1043 = vmax.f32 %v968, %v1030
        %v1044 = vld [vmem:[%s3] sm:$0x3]
        %v1046 = vlaneseq
        %v1047 = vshrl.u32 %v1046, 7
        %v1048 = vsub.s32 0, %v1047
        %v1049 = vrot.slane %v1044, %v1048
        %v1050 = vlaneseq
        %v1051 = vshrl.u32 %v1050, 7
        %v1052 = vsub.s32 1, %v1051
        %v1053 = vrot.slane %v1044, %v1052
        %v1056 = vadd.f32 %v1032, %v1049
        %v1057 = vadd.f32 %v1033, %v1053
        %v1058 = vadd.f32 %v1034, %v1049
        %v1059 = vadd.f32 %v1035, %v1053
        %v1060 = vadd.f32 %v1036, %v1049
        %v1061 = vadd.f32 %v1037, %v1053
        %v1062 = vadd.f32 %v1038, %v1049
        %v1063 = vadd.f32 %v1039, %v1053
        %v1064 = vadd.f32 %v1040, %v1049
        %v1065 = vadd.f32 %v1041, %v1053
        %v1066 = vadd.f32 %v1042, %v1049
        %v1067 = vadd.f32 %v1043, %v1053
        %v1068 = vmax.f32 %v1056, 0.0
        %v1069 = vmax.f32 %v1057, 0.0
        %v1070 = vmax.f32 %v1058, 0.0
        %v1071 = vmax.f32 %v1059, 0.0
        %v1072 = vmax.f32 %v1060, 0.0
        %v1073 = vmax.f32 %v1061, 0.0
        %v1074 = vmax.f32 %v1062, 0.0
        %v1075 = vmax.f32 %v1063, 0.0
        %v1076 = vmax.f32 %v1064, 0.0
        %v1077 = vmax.f32 %v1065, 0.0
        %v1078 = vmax.f32 %v1066, 0.0
        %v1079 = vmax.f32 %v1067, 0.0
        %v1080 = vpack.c.bf16 %v1070, %v1068
        %v1081 = vpack.c.bf16 %v1071, %v1069
        %v1082 = vpack.c.bf16 %v1074, %v1072
        %v1083 = vpack.c.bf16 %v1075, %v1073
        %v1084 = vpack.c.bf16 %v1078, %v1076
        %v1085 = vpack.c.bf16 %v1079, %v1077
        %v1086 = vld [vmem:[%s4] sm:$0xff]
        %v1087 = vld [vmem:[%s4 + $0x8] sm:$0xff]
        %v1088 = vld [vmem:[%s4 + $0x10] sm:$0xff]
        %v1089 = vld [vmem:[%s4 + $0x18] sm:$0xff]
        %v1090 = vld [vmem:[%s4 + $0x20] sm:$0xff]
        %v1091 = vld [vmem:[%s4 + $0x28] sm:$0xff]
        %v1092 = vld [vmem:[%s4 + $0x30] sm:$0xff]
        %v1093 = vld [vmem:[%s4 + $0x38] sm:$0xff]
        %v1094 = vld [vmem:[%s4 + $0x40] sm:$0xff]
        %v1095 = vld [vmem:[%s4 + $0x48] sm:$0xff]
        %v1096 = vld [vmem:[%s4 + $0x50] sm:$0xff]
        %v1097 = vld [vmem:[%s4 + $0x58] sm:$0xff]
        %v1098 = vld [vmem:[%s4 + $0x60] sm:$0xff]
        %v1099 = vld [vmem:[%s4 + $0x68] sm:$0xff]
        %v1100 = vld [vmem:[%s4 + $0x70] sm:$0xff]
        %v1101 = vld [vmem:[%s4 + $0x78] sm:$0xff]
        %v1102 = vld [vmem:[%s4 + $0x80] sm:$0xff]
        %v1103 = vld [vmem:[%s4 + $0x88] sm:$0xff]
        %v1104 = vld [vmem:[%s4 + $0x90] sm:$0xff]
        %v1105 = vld [vmem:[%s4 + $0x98] sm:$0xff]
        %v1106 = vld [vmem:[%s4 + $0xa0] sm:$0xff]
        %v1107 = vld [vmem:[%s4 + $0xa8] sm:$0xff]
        %s1108 = scalar_lea.vmem %s4, 176
        %v1109 = vld [vmem:[%s1108] sm:$0xff]
        %v1110 = vld [vmem:[%s1108 + $0x8] sm:$0xff]
        %v1111 = vld [vmem:[%s1108 + $0x10] sm:$0xff]
        %v1112 = vld [vmem:[%s1108 + $0x18] sm:$0xff]
        %v1113 = vld [vmem:[%s1108 + $0x20] sm:$0xff]
        %v1114 = vld [vmem:[%s1108 + $0x28] sm:$0xff]
        %v1115 = vld [vmem:[%s1108 + $0x30] sm:$0xff]
        %v1116 = vld [vmem:[%s1108 + $0x38] sm:$0xff]
        %v1117 = vld [vmem:[%s1108 + $0x40] sm:$0xff]
        %v1118 = vld [vmem:[%s1108 + $0x48] sm:$0xff]
        %v1119 = vld [vmem:[%s1108 + $0x50] sm:$0xff]
        %v1120 = vld [vmem:[%s1108 + $0x58] sm:$0xff]
        %v1121 = vld [vmem:[%s1108 + $0x60] sm:$0xff]
        %v1122 = vld [vmem:[%s1108 + $0x68] sm:$0xff]
        %v1123 = vld [vmem:[%s1108 + $0x70] sm:$0xff]
        %v1124 = vld [vmem:[%s1108 + $0x78] sm:$0xff]
        %v1125 = vld [vmem:[%s1108 + $0x80] sm:$0xff]
        %v1126 = vld [vmem:[%s1108 + $0x88] sm:$0xff]
        %v1127 = vld [vmem:[%s1108 + $0x90] sm:$0xff]
        %v1128 = vld [vmem:[%s1108 + $0x98] sm:$0xff]
        %v1129 = vld [vmem:[%s1108 + $0xa0] sm:$0xff]
        %v1130 = vld [vmem:[%s1108 + $0xa8] sm:$0xff]
        %vm1137 = vcmask 1045504
        %v1138 = vrot.slane %v1080, 2
        %v1139 = vrot.slane %v1082, 2
        %v1140 = vsel %vm1137, %v1138, %v1139
        %v1141 = vrot.slane %v1081, 2
        %v1142 = vrot.slane %v1083, 2
        %v1143 = vsel %vm1137, %v1141, %v1142
        %v1144 = vrot.slane %v1084, 2
        %v1145 = vsel %vm1137, %v1139, %v1144
        %v1146 = vrot.slane %v1085, 2
        %v1147 = vsel %vm1137, %v1142, %v1146
        %v1172 = vunpack.c.l.b16 %v1109
        %v1173 = vunpack.c.h.b16 %v1109
        %v1174 = vunpack.c.l.b16 %v1110
        %v1175 = vunpack.c.h.b16 %v1110
        %v1176 = vunpack.c.l.b16 %v1111
        %v1177 = vunpack.c.h.b16 %v1111
        %v1178 = vunpack.c.l.b16 %v1112
        %v1179 = vunpack.c.h.b16 %v1112
        %v1180 = vunpack.c.l.b16 %v1113
        %v1181 = vunpack.c.h.b16 %v1113
        %v1182 = vunpack.c.l.b16 %v1114
        %v1183 = vunpack.c.h.b16 %v1114
        %v1184 = vunpack.c.l.b16 %v1115
        %v1185 = vunpack.c.h.b16 %v1115
        %v1186 = vunpack.c.l.b16 %v1116
        %v1187 = vunpack.c.h.b16 %v1116
        %v1188 = vunpack.c.l.b16 %v1117
        %v1189 = vunpack.c.h.b16 %v1117
        %v1190 = vunpack.c.l.b16 %v1118
        %v1191 = vunpack.c.h.b16 %v1118
        %v1192 = vunpack.c.l.b16 %v1119
        %v1193 = vunpack.c.h.b16 %v1119
        %v1194 = vunpack.c.l.b16 %v1120
        %v1195 = vunpack.c.h.b16 %v1120
        %v1196 = vunpack.c.l.b16 %v1121
        %v1197 = vunpack.c.h.b16 %v1121
        %v1198 = vunpack.c.l.b16 %v1122
        %v1199 = vunpack.c.h.b16 %v1122
        %v1200 = vunpack.c.l.b16 %v1123
        %v1201 = vunpack.c.h.b16 %v1123
        %v1202 = vunpack.c.l.b16 %v1124
        %v1203 = vunpack.c.h.b16 %v1124
        %v1204 = vunpack.c.l.b16 %v1125
        %v1205 = vunpack.c.h.b16 %v1125
        %v1206 = vunpack.c.l.b16 %v1126
        %v1207 = vunpack.c.h.b16 %v1126
        %v1208 = vunpack.c.l.b16 %v1127
        %v1209 = vunpack.c.h.b16 %v1127
        %v1210 = vunpack.c.l.b16 %v1128
        %v1211 = vunpack.c.h.b16 %v1128
        %v1212 = vunpack.c.l.b16 %v1129
        %v1213 = vunpack.c.h.b16 %v1129
        %v1214 = vunpack.c.l.b16 %v1130
        %v1215 = vunpack.c.h.b16 %v1130
        %v1216 = vpack.c.b16 %v1174, %v1172
        %v1217 = vpack.c.b16 %v1175, %v1173
        %v1218 = vpack.c.b16 %v1178, %v1176
        %v1219 = vpack.c.b16 %v1179, %v1177
        %v1220 = vpack.c.b16 %v1182, %v1180
        %v1221 = vpack.c.b16 %v1183, %v1181
        %v1222 = vpack.c.b16 %v1186, %v1184
        %v1223 = vpack.c.b16 %v1187, %v1185
        %v1224 = vpack.c.b16 %v1190, %v1188
        %v1225 = vpack.c.b16 %v1191, %v1189
        %v1226 = vpack.c.b16 %v1194, %v1192
        %v1227 = vpack.c.b16 %v1195, %v1193
        %v1228 = vpack.c.b16 %v1198, %v1196
        %v1229 = vpack.c.b16 %v1199, %v1197
        %v1230 = vpack.c.b16 %v1202, %v1200
        %v1231 = vpack.c.b16 %v1203, %v1201
        %v1232 = vpack.c.b16 %v1206, %v1204
        %v1233 = vpack.c.b16 %v1207, %v1205
        %v1234 = vpack.c.b16 %v1210, %v1208
        %v1235 = vpack.c.b16 %v1211, %v1209
        %v1236 = vpack.c.b16 %v1214, %v1212
        %v1237 = vpack.c.b16 %v1215, %v1213
        %vm1260 = vcmask 392192
        %v1262 = vsel %vm1260, %v1143, 0
        %v1265 = vsel %vm1260, %v1147, 0
        %1267 = vmatprep.subr.bf16.mxu0 %v1217
        %1268 = vmatpush1.bf16.msra.mxu0 %v1216
        %1269 = vmatprep.subr.bf16.mxu0 %v1219
        %1270 = vmatpush1.bf16.msra.mxu0 %v1218
        %1271 = vmatprep.subr.bf16.mxu0 %v1221
        %1272 = vmatpush1.bf16.msra.mxu0 %v1220
        %1273 = vmatprep.subr.bf16.mxu0 %v1223
        %1274 = vmatpush1.bf16.msra.mxu0 %v1222
        %1275 = vmatprep.subr.bf16.mxu0 %v1225
        %1276 = vmatpush1.bf16.msra.mxu0 %v1224
        %1277 = vmatprep.subr.bf16.mxu0 %v1227
        %1278 = vmatpush1.bf16.msra.mxu0 %v1226
        %1279 = vmatprep.subr.bf16.mxu0 %v1229
        %1280 = vmatpush1.bf16.msra.mxu0 %v1228
        %1281 = vmatprep.subr.bf16.mxu0 %v1231
        %1282 = vmatpush1.bf16.msra.mxu0 %v1230
        %1283 = vmatprep.subr.bf16.mxu0 %v1233
        %1284 = vmatpush1.bf16.msra.mxu0 %v1232
        %1285 = vmatprep.subr.bf16.mxu0 %v1235
        %1286 = vmatpush1.bf16.msra.mxu0 %v1234
        %1287 = vmatprep.subr.bf16.mxu0 %v1237
        %1288 = vmatpush1.bf16.msra.mxu0 %v1236
        %1289 = vmatprep.subr.bf16.mxu0 0
        %1290 = vmatpush1.bf16.msra.mxu0 0
        %1291 = vmatprep.subr.bf16.mxu0 0
        %1292 = vmatpush1.bf16.msra.mxu0 0
        %1293 = vmatprep.subr.bf16.mxu0 0
        %1294 = vmatpush1.bf16.msra.mxu0 0
        %1295 = vmatprep.subr.bf16.mxu0 0
        %1296 = vmatpush1.bf16.msra.mxu0 0
        %1297 = vmatprep.subr.bf16.mxu0 0
        %1298 = vmatpush1.bf16.msra.mxu0 0
        %1299 = vmatprep.mubr.bf16.mxu0 %v1262
        %1300 = vmatmul.mubr.bf16.gmra.mrb[0].mxu0 %v1140
        %v1301 = vpop.f32.mrb[0].mxu0
        %v1302 = vadd.f32 0.0, %v1301
        %v1303 = vpop.f32.mrb[0].mxu0
        %v1304 = vadd.f32 0.0, %v1303
        %v1305 = vpop.f32.mrb[0].mxu0
        %v1306 = vadd.f32 0.0, %v1305
        %v1307 = vpop.f32.mrb[0].mxu0
        %v1308 = vadd.f32 0.0, %v1307
        %1309 = vmatprep.mubr.bf16.mxu0 %v1265
        %1310 = vmatmul.mubr.bf16.gmra.mrb[0].mxu0 %v1145
        %v1311 = vpop.f32.mrb[0].mxu0
        %v1312 = vadd.f32 0.0, %v1311
        %v1313 = vpop.f32.mrb[0].mxu0
        %v1314 = vadd.f32 0.0, %v1313
        %v1315 = vpop.f32.mrb[0].mxu0
        %v1316 = vadd.f32 0.0, %v1315
        %v1317 = vpop.f32.mrb[0].mxu0
        %v1318 = vadd.f32 0.0, %v1317
        %1319 = vdwg.mxu0
        %v1342 = vunpack.c.l.b16 %v1086
        %v1343 = vunpack.c.h.b16 %v1086
        %v1344 = vunpack.c.l.b16 %v1087
        %v1345 = vunpack.c.h.b16 %v1087
        %v1346 = vunpack.c.l.b16 %v1088
        %v1347 = vunpack.c.h.b16 %v1088
        %v1348 = vunpack.c.l.b16 %v1089
        %v1349 = vunpack.c.h.b16 %v1089
        %v1350 = vunpack.c.l.b16 %v1090
        %v1351 = vunpack.c.h.b16 %v1090
        %v1352 = vunpack.c.l.b16 %v1091
        %v1353 = vunpack.c.h.b16 %v1091
        %v1354 = vunpack.c.l.b16 %v1092
        %v1355 = vunpack.c.h.b16 %v1092
        %v1356 = vunpack.c.l.b16 %v1093
        %v1357 = vunpack.c.h.b16 %v1093
        %v1358 = vunpack.c.l.b16 %v1094
        %v1359 = vunpack.c.h.b16 %v1094
        %v1360 = vunpack.c.l.b16 %v1095
        %v1361 = vunpack.c.h.b16 %v1095
        %v1362 = vunpack.c.l.b16 %v1096
        %v1363 = vunpack.c.h.b16 %v1096
        %v1364 = vunpack.c.l.b16 %v1097
        %v1365 = vunpack.c.h.b16 %v1097
        %v1366 = vunpack.c.l.b16 %v1098
        %v1367 = vunpack.c.h.b16 %v1098
        %v1368 = vunpack.c.l.b16 %v1099
        %v1369 = vunpack.c.h.b16 %v1099
        %v1370 = vunpack.c.l.b16 %v1100
        %v1371 = vunpack.c.h.b16 %v1100
        %v1372 = vunpack.c.l.b16 %v1101
        %v1373 = vunpack.c.h.b16 %v1101
        %v1374 = vunpack.c.l.b16 %v1102
        %v1375 = vunpack.c.h.b16 %v1102
        %v1376 = vunpack.c.l.b16 %v1103
        %v1377 = vunpack.c.h.b16 %v1103
        %v1378 = vunpack.c.l.b16 %v1104
        %v1379 = vunpack.c.h.b16 %v1104
        %v1380 = vunpack.c.l.b16 %v1105
        %v1381 = vunpack.c.h.b16 %v1105
        %v1382 = vunpack.c.l.b16 %v1106
        %v1383 = vunpack.c.h.b16 %v1106
        %v1384 = vunpack.c.l.b16 %v1107
        %v1385 = vunpack.c.h.b16 %v1107
        %v1386 = vpack.c.b16 %v1344, %v1342
        %v1387 = vpack.c.b16 %v1345, %v1343
        %v1388 = vpack.c.b16 %v1348, %v1346
        %v1389 = vpack.c.b16 %v1349, %v1347
        %v1390 = vpack.c.b16 %v1352, %v1350
        %v1391 = vpack.c.b16 %v1353, %v1351
        %v1392 = vpack.c.b16 %v1356, %v1354
        %v1393 = vpack.c.b16 %v1357, %v1355
        %v1394 = vpack.c.b16 %v1360, %v1358
        %v1395 = vpack.c.b16 %v1361, %v1359
        %v1396 = vpack.c.b16 %v1364, %v1362
        %v1397 = vpack.c.b16 %v1365, %v1363
        %v1398 = vpack.c.b16 %v1368, %v1366
        %v1399 = vpack.c.b16 %v1369, %v1367
        %v1400 = vpack.c.b16 %v1372, %v1370
        %v1401 = vpack.c.b16 %v1373, %v1371
        %v1402 = vpack.c.b16 %v1376, %v1374
        %v1403 = vpack.c.b16 %v1377, %v1375
        %v1404 = vpack.c.b16 %v1380, %v1378
        %v1405 = vpack.c.b16 %v1381, %v1379
        %v1406 = vpack.c.b16 %v1384, %v1382
        %v1407 = vpack.c.b16 %v1385, %v1383
        %v1431 = vsel %vm1260, %v1081, 0
        %v1434 = vsel %vm1260, %v1083, 0
        %1436 = vmatprep.subr.bf16.mxu0 %v1387
        %1437 = vmatpush1.bf16.msra.mxu0 %v1386
        %1438 = vmatprep.subr.bf16.mxu0 %v1389
        %1439 = vmatpush1.bf16.msra.mxu0 %v1388
        %1440 = vmatprep.subr.bf16.mxu0 %v1391
        %1441 = vmatpush1.bf16.msra.mxu0 %v1390
        %1442 = vmatprep.subr.bf16.mxu0 %v1393
        %1443 = vmatpush1.bf16.msra.mxu0 %v1392
        %1444 = vmatprep.subr.bf16.mxu0 %v1395
        %1445 = vmatpush1.bf16.msra.mxu0 %v1394
        %1446 = vmatprep.subr.bf16.mxu0 %v1397
        %1447 = vmatpush1.bf16.msra.mxu0 %v1396
        %1448 = vmatprep.subr.bf16.mxu0 %v1399
        %1449 = vmatpush1.bf16.msra.mxu0 %v1398
        %1450 = vmatprep.subr.bf16.mxu0 %v1401
        %1451 = vmatpush1.bf16.msra.mxu0 %v1400
        %1452 = vmatprep.subr.bf16.mxu0 %v1403
        %1453 = vmatpush1.bf16.msra.mxu0 %v1402
        %1454 = vmatprep.subr.bf16.mxu0 %v1405
        %1455 = vmatpush1.bf16.msra.mxu0 %v1404
        %1456 = vmatprep.subr.bf16.mxu0 %v1407
        %1457 = vmatpush1.bf16.msra.mxu0 %v1406
        %1458 = vmatprep.subr.bf16.mxu0 0
        %1459 = vmatpush1.bf16.msra.mxu0 0
        %1460 = vmatprep.subr.bf16.mxu0 0
        %1461 = vmatpush1.bf16.msra.mxu0 0
        %1462 = vmatprep.subr.bf16.mxu0 0
        %1463 = vmatpush1.bf16.msra.mxu0 0
        %1464 = vmatprep.subr.bf16.mxu0 0
        %1465 = vmatpush1.bf16.msra.mxu0 0
        %1466 = vmatprep.subr.bf16.mxu0 0
        %1467 = vmatpush1.bf16.msra.mxu0 0
        %1468 = vmatprep.mubr.bf16.mxu0 %v1431
        %1469 = vmatmul.mubr.bf16.gmra.mrb[0].mxu0 %v1080
        %v1470 = vpop.f32.mrb[0].mxu0
        %v1471 = vadd.f32 %v1302, %v1470
        %v1472 = vpop.f32.mrb[0].mxu0
        %v1473 = vadd.f32 %v1304, %v1472
        %v1474 = vpop.f32.mrb[0].mxu0
        %v1475 = vadd.f32 %v1306, %v1474
        %v1476 = vpop.f32.mrb[0].mxu0
        %v1477 = vadd.f32 %v1308, %v1476
        %1478 = vmatprep.mubr.bf16.mxu0 %v1434
        %1479 = vmatmul.mubr.bf16.gmra.mrb[0].mxu0 %v1082
        %v1480 = vpop.f32.mrb[0].mxu0
        %v1481 = vadd.f32 %v1312, %v1480
        %v1482 = vpop.f32.mrb[0].mxu0
        %v1483 = vadd.f32 %v1314, %v1482
        %v1484 = vpop.f32.mrb[0].mxu0
        %v1485 = vadd.f32 %v1316, %v1484
        %v1486 = vpop.f32.mrb[0].mxu0
        %v1487 = vadd.f32 %v1318, %v1486
        %1488 = vdwg.mxu0
        %s1489 = scalar_lea.vmem %s4, 352
        %v1490 = vld [vmem:[%s1489] sm:$0xff]
        %v1491 = vld [vmem:[%s1489 + $0x8] sm:$0xff]
        %v1492 = vld [vmem:[%s1489 + $0x10] sm:$0xff]
        %v1493 = vld [vmem:[%s1489 + $0x18] sm:$0xff]
        %v1494 = vld [vmem:[%s1489 + $0x20] sm:$0xff]
        %v1495 = vld [vmem:[%s1489 + $0x28] sm:$0xff]
        %v1496 = vld [vmem:[%s1489 + $0x30] sm:$0xff]
        %v1497 = vld [vmem:[%s1489 + $0x38] sm:$0xff]
        %v1498 = vld [vmem:[%s1489 + $0x40] sm:$0xff]
        %v1499 = vld [vmem:[%s1489 + $0x48] sm:$0xff]
        %v1500 = vld [vmem:[%s1489 + $0x50] sm:$0xff]
        %v1501 = vld [vmem:[%s1489 + $0x58] sm:$0xff]
        %v1502 = vld [vmem:[%s1489 + $0x60] sm:$0xff]
        %v1503 = vld [vmem:[%s1489 + $0x68] sm:$0xff]
        %v1504 = vld [vmem:[%s1489 + $0x70] sm:$0xff]
        %v1505 = vld [vmem:[%s1489 + $0x78] sm:$0xff]
        %v1506 = vld [vmem:[%s1489 + $0x80] sm:$0xff]
        %v1507 = vld [vmem:[%s1489 + $0x88] sm:$0xff]
        %v1508 = vld [vmem:[%s1489 + $0x90] sm:$0xff]
        %v1509 = vld [vmem:[%s1489 + $0x98] sm:$0xff]
        %v1510 = vld [vmem:[%s1489 + $0xa0] sm:$0xff]
        %v1511 = vld [vmem:[%s1489 + $0xa8] sm:$0xff]
        %vm1512 = vcmask 1043456
        %v1513 = vrot.slane %v1080, 4
        %v1514 = vrot.slane %v1082, 4
        %v1515 = vsel %vm1512, %v1513, %v1514
        %v1516 = vrot.slane %v1081, 4
        %v1517 = vrot.slane %v1083, 4
        %v1518 = vsel %vm1512, %v1516, %v1517
        %v1519 = vrot.slane %v1084, 4
        %v1520 = vsel %vm1512, %v1514, %v1519
        %v1521 = vrot.slane %v1085, 4
        %v1522 = vsel %vm1512, %v1517, %v1521
        %v1547 = vunpack.c.l.b16 %v1490
        %v1548 = vunpack.c.h.b16 %v1490
        %v1549 = vunpack.c.l.b16 %v1491
        %v1550 = vunpack.c.h.b16 %v1491
        %v1551 = vunpack.c.l.b16 %v1492
        %v1552 = vunpack.c.h.b16 %v1492
        %v1553 = vunpack.c.l.b16 %v1493
        %v1554 = vunpack.c.h.b16 %v1493
        %v1555 = vunpack.c.l.b16 %v1494
        %v1556 = vunpack.c.h.b16 %v1494
        %v1557 = vunpack.c.l.b16 %v1495
        %v1558 = vunpack.c.h.b16 %v1495
        %v1559 = vunpack.c.l.b16 %v1496
        %v1560 = vunpack.c.h.b16 %v1496
        %v1561 = vunpack.c.l.b16 %v1497
        %v1562 = vunpack.c.h.b16 %v1497
        %v1563 = vunpack.c.l.b16 %v1498
        %v1564 = vunpack.c.h.b16 %v1498
        %v1565 = vunpack.c.l.b16 %v1499
        %v1566 = vunpack.c.h.b16 %v1499
        %v1567 = vunpack.c.l.b16 %v1500
        %v1568 = vunpack.c.h.b16 %v1500
        %v1569 = vunpack.c.l.b16 %v1501
        %v1570 = vunpack.c.h.b16 %v1501
        %v1571 = vunpack.c.l.b16 %v1502
        %v1572 = vunpack.c.h.b16 %v1502
        %v1573 = vunpack.c.l.b16 %v1503
        %v1574 = vunpack.c.h.b16 %v1503
        %v1575 = vunpack.c.l.b16 %v1504
        %v1576 = vunpack.c.h.b16 %v1504
        %v1577 = vunpack.c.l.b16 %v1505
        %v1578 = vunpack.c.h.b16 %v1505
        %v1579 = vunpack.c.l.b16 %v1506
        %v1580 = vunpack.c.h.b16 %v1506
        %v1581 = vunpack.c.l.b16 %v1507
        %v1582 = vunpack.c.h.b16 %v1507
        %v1583 = vunpack.c.l.b16 %v1508
        %v1584 = vunpack.c.h.b16 %v1508
        %v1585 = vunpack.c.l.b16 %v1509
        %v1586 = vunpack.c.h.b16 %v1509
        %v1587 = vunpack.c.l.b16 %v1510
        %v1588 = vunpack.c.h.b16 %v1510
        %v1589 = vunpack.c.l.b16 %v1511
        %v1590 = vunpack.c.h.b16 %v1511
        %v1591 = vpack.c.b16 %v1549, %v1547
        %v1592 = vpack.c.b16 %v1550, %v1548
        %v1593 = vpack.c.b16 %v1553, %v1551
        %v1594 = vpack.c.b16 %v1554, %v1552
        %v1595 = vpack.c.b16 %v1557, %v1555
        %v1596 = vpack.c.b16 %v1558, %v1556
        %v1597 = vpack.c.b16 %v1561, %v1559
        %v1598 = vpack.c.b16 %v1562, %v1560
        %v1599 = vpack.c.b16 %v1565, %v1563
        %v1600 = vpack.c.b16 %v1566, %v1564
        %v1601 = vpack.c.b16 %v1569, %v1567
        %v1602 = vpack.c.b16 %v1570, %v1568
        %v1603 = vpack.c.b16 %v1573, %v1571
        %v1604 = vpack.c.b16 %v1574, %v1572
        %v1605 = vpack.c.b16 %v1577, %v1575
        %v1606 = vpack.c.b16 %v1578, %v1576
        %v1607 = vpack.c.b16 %v1581, %v1579
        %v1608 = vpack.c.b16 %v1582, %v1580
        %v1609 = vpack.c.b16 %v1585, %v1583
        %v1610 = vpack.c.b16 %v1586, %v1584
        %v1611 = vpack.c.b16 %v1589, %v1587
        %v1612 = vpack.c.b16 %v1590, %v1588
        %v1636 = vsel %vm1260, %v1518, 0
        %v1639 = vsel %vm1260, %v1522, 0
        %1641 = vmatprep.subr.bf16.mxu0 %v1592
        %1642 = vmatpush1.bf16.msra.mxu0 %v1591
        %1643 = vmatprep.subr.bf16.mxu0 %v1594
        %1644 = vmatpush1.bf16.msra.mxu0 %v1593
        %1645 = vmatprep.subr.bf16.mxu0 %v1596
        %1646 = vmatpush1.bf16.msra.mxu0 %v1595
        %1647 = vmatprep.subr.bf16.mxu0 %v1598
        %1648 = vmatpush1.bf16.msra.mxu0 %v1597
        %1649 = vmatprep.subr.bf16.mxu0 %v1600
        %1650 = vmatpush1.bf16.msra.mxu0 %v1599
        %1651 = vmatprep.subr.bf16.mxu0 %v1602
        %1652 = vmatpush1.bf16.msra.mxu0 %v1601
        %1653 = vmatprep.subr.bf16.mxu0 %v1604
        %1654 = vmatpush1.bf16.msra.mxu0 %v1603
        %1655 = vmatprep.subr.bf16.mxu0 %v1606
        %1656 = vmatpush1.bf16.msra.mxu0 %v1605
        %1657 = vmatprep.subr.bf16.mxu0 %v1608
        %1658 = vmatpush1.bf16.msra.mxu0 %v1607
        %1659 = vmatprep.subr.bf16.mxu0 %v1610
        %1660 = vmatpush1.bf16.msra.mxu0 %v1609
        %1661 = vmatprep.subr.bf16.mxu0 %v1612
        %1662 = vmatpush1.bf16.msra.mxu0 %v1611
        %1663 = vmatprep.subr.bf16.mxu0 0
        %1664 = vmatpush1.bf16.msra.mxu0 0
        %1665 = vmatprep.subr.bf16.mxu0 0
        %1666 = vmatpush1.bf16.msra.mxu0 0
        %1667 = vmatprep.subr.bf16.mxu0 0
        %1668 = vmatpush1.bf16.msra.mxu0 0
        %1669 = vmatprep.subr.bf16.mxu0 0
        %1670 = vmatpush1.bf16.msra.mxu0 0
        %1671 = vmatprep.subr.bf16.mxu0 0
        %1672 = vmatpush1.bf16.msra.mxu0 0
        %1673 = vmatprep.mubr.bf16.mxu0 %v1636
        %1674 = vmatmul.mubr.bf16.gmra.mrb[0].mxu0 %v1515
        %v1675 = vpop.f32.mrb[0].mxu0
        %v1676 = vadd.f32 0.0, %v1675
        %v1677 = vpop.f32.mrb[0].mxu0
        %v1678 = vadd.f32 0.0, %v1677
        %v1679 = vpop.f32.mrb[0].mxu0
        %v1680 = vadd.f32 0.0, %v1679
        %v1681 = vpop.f32.mrb[0].mxu0
        %v1682 = vadd.f32 0.0, %v1681
        %1683 = vmatprep.mubr.bf16.mxu0 %v1639
        %1684 = vmatmul.mubr.bf16.gmra.mrb[0].mxu0 %v1520
        %v1685 = vpop.f32.mrb[0].mxu0
        %v1686 = vadd.f32 0.0, %v1685
        %v1687 = vpop.f32.mrb[0].mxu0
        %v1688 = vadd.f32 0.0, %v1687
        %v1689 = vpop.f32.mrb[0].mxu0
        %v1690 = vadd.f32 0.0, %v1689
        %v1691 = vpop.f32.mrb[0].mxu0
        %v1692 = vadd.f32 0.0, %v1691
        %1693 = vdwg.mxu0
        %v1694 = vadd.f32 %v1471, %v1676
        %v1695 = vadd.f32 %v1473, %v1678
        %v1696 = vadd.f32 %v1475, %v1680
        %v1697 = vadd.f32 %v1477, %v1682
        %v1698 = vadd.f32 %v1481, %v1686
        %v1699 = vadd.f32 %v1483, %v1688
        %v1700 = vadd.f32 %v1485, %v1690
        %v1701 = vadd.f32 %v1487, %v1692
        %v1702 = vmax.f32 %v1694, %v1695
        %v1703 = vmax.f32 %v1696, %v1697
        %v1704 = vmax.f32 %v1698, %v1699
        %v1705 = vmax.f32 %v1700, %v1701
        %v1706 = vld [vmem:[%s5] sm:$0x1]
        %v1708 = vrot.slane %v1702, 4
        %v1710 = vmax.f32 %v1702, %v1708
        %v1712 = vlaneseq
        %v1713 = vshrl.u32 %v1712, 7
        %v1714 = vsub.s32 0, %v1713
        %v1715 = vrot.slane %v1706, %v1714
        %v1717 = vadd.f32 %v1710, %v1715
        %v1718 = vmax.f32 %v1717, 0.0
        %v1719 = vpack.c.bf16 %v1718, %v1718
        %v1720 = vld [vmem:[%s6] sm:$0xf]
        %v1721 = vld [vmem:[%s6 + $0x4] sm:$0xf]
        %v1722 = vld [vmem:[%s6 + $0x8] sm:$0xf]
        %v1723 = vld [vmem:[%s6 + $0xc] sm:$0xf]
        %v1724 = vld [vmem:[%s6 + $0x10] sm:$0xf]
        %v1725 = vld [vmem:[%s6 + $0x14] sm:$0xf]
        %v1726 = vld [vmem:[%s6 + $0x18] sm:$0xf]
        %v1727 = vld [vmem:[%s6 + $0x1c] sm:$0xf]
        %v1728 = vld [vmem:[%s6 + $0x20] sm:$0xf]
        %v1729 = vld [vmem:[%s6 + $0x24] sm:$0xf]
        %v1730 = vld [vmem:[%s6 + $0x28] sm:$0xf]
        %v1731 = vld [vmem:[%s6 + $0x2c] sm:$0xf]
        %v1732 = vld [vmem:[%s6 + $0x30] sm:$0xf]
        %v1733 = vld [vmem:[%s6 + $0x34] sm:$0xf]
        %v1734 = vld [vmem:[%s6 + $0x38] sm:$0xf]
        %v1735 = vld [vmem:[%s6 + $0x3c] sm:$0xf]
        %v1737 = vrot.slane %v1703, 4
        %v1739 = vmax.f32 %v1703, %v1737
        %v1740 = vadd.f32 %v1739, %v1715
        %v1741 = vmax.f32 %v1740, 0.0
        %v1742 = vpack.c.bf16 %v1741, %v1741
        %s1743 = scalar_lea.vmem %s6, 64
        %v1744 = vld [vmem:[%s1743] sm:$0xf]
        %v1745 = vld [vmem:[%s1743 + $0x4] sm:$0xf]
        %v1746 = vld [vmem:[%s1743 + $0x8] sm:$0xf]
        %v1747 = vld [vmem:[%s1743 + $0xc] sm:$0xf]
        %v1748 = vld [vmem:[%s1743 + $0x10] sm:$0xf]
        %v1749 = vld [vmem:[%s1743 + $0x14] sm:$0xf]
        %v1750 = vld [vmem:[%s1743 + $0x18] sm:$0xf]
        %v1751 = vld [vmem:[%s1743 + $0x1c] sm:$0xf]
        %v1752 = vld [vmem:[%s1743 + $0x20] sm:$0xf]
        %v1753 = vld [vmem:[%s1743 + $0x24] sm:$0xf]
        %v1754 = vld [vmem:[%s1743 + $0x28] sm:$0xf]
        %v1755 = vld [vmem:[%s1743 + $0x2c] sm:$0xf]
        %v1756 = vld [vmem:[%s1743 + $0x30] sm:$0xf]
        %v1757 = vld [vmem:[%s1743 + $0x34] sm:$0xf]
        %v1758 = vld [vmem:[%s1743 + $0x38] sm:$0xf]
        %v1759 = vld [vmem:[%s1743 + $0x3c] sm:$0xf]
        %v1776 = vunpack.c.l.b16 %v1744
        %v1777 = vunpack.c.l.b16 %v1745
        %v1778 = vunpack.c.l.b16 %v1746
        %v1779 = vunpack.c.l.b16 %v1747
        %v1780 = vunpack.c.l.b16 %v1748
        %v1781 = vunpack.c.l.b16 %v1749
        %v1782 = vunpack.c.l.b16 %v1750
        %v1783 = vunpack.c.l.b16 %v1751
        %v1784 = vunpack.c.l.b16 %v1752
        %v1785 = vunpack.c.l.b16 %v1753
        %v1786 = vunpack.c.l.b16 %v1754
        %v1787 = vunpack.c.l.b16 %v1755
        %v1788 = vunpack.c.l.b16 %v1756
        %v1789 = vunpack.c.l.b16 %v1757
        %v1790 = vunpack.c.l.b16 %v1758
        %v1791 = vunpack.c.l.b16 %v1759
        %v1792 = vpack.c.b16 %v1777, %v1776
        %v1793 = vpack.c.b16 %v1779, %v1778
        %v1794 = vpack.c.b16 %v1781, %v1780
        %v1795 = vpack.c.b16 %v1783, %v1782
        %v1796 = vpack.c.b16 %v1785, %v1784
        %v1797 = vpack.c.b16 %v1787, %v1786
        %v1798 = vpack.c.b16 %v1789, %v1788
        %v1799 = vpack.c.b16 %v1791, %v1790
        %1808 = vmatprep.subr.bf16.mxu0 0
        %1809 = vmatpush1.bf16.msra.mxu0 %v1792
        %1810 = vmatprep.subr.bf16.mxu0 0
        %1811 = vmatpush1.bf16.msra.mxu0 %v1793
        %1812 = vmatprep.subr.bf16.mxu0 0
        %1813 = vmatpush1.bf16.msra.mxu0 %v1794
        %1814 = vmatprep.subr.bf16.mxu0 0
        %1815 = vmatpush1.bf16.msra.mxu0 %v1795
        %1816 = vmatprep.subr.bf16.mxu0 0
        %1817 = vmatpush1.bf16.msra.mxu0 %v1796
        %1818 = vmatprep.subr.bf16.mxu0 0
        %1819 = vmatpush1.bf16.msra.mxu0 %v1797
        %1820 = vmatprep.subr.bf16.mxu0 0
        %1821 = vmatpush1.bf16.msra.mxu0 %v1798
        %1822 = vmatprep.subr.bf16.mxu0 0
        %1823 = vmatpush1.bf16.msra.mxu0 %v1799
        %1824 = vmatprep.subr.bf16.mxu0 0
        %1825 = vmatpush1.bf16.msra.mxu0 0
        %1826 = vmatprep.subr.bf16.mxu0 0
        %1827 = vmatpush1.bf16.msra.mxu0 0
        %1828 = vmatprep.subr.bf16.mxu0 0
        %1829 = vmatpush1.bf16.msra.mxu0 0
        %1830 = vmatprep.subr.bf16.mxu0 0
        %1831 = vmatpush1.bf16.msra.mxu0 0
        %1832 = vmatprep.subr.bf16.mxu0 0
        %1833 = vmatpush1.bf16.msra.mxu0 0
        %1834 = vmatprep.subr.bf16.mxu0 0
        %1835 = vmatpush1.bf16.msra.mxu0 0
        %1836 = vmatprep.subr.bf16.mxu0 0
        %1837 = vmatpush1.bf16.msra.mxu0 0
        %1838 = vmatprep.subr.bf16.mxu0 0
        %1839 = vmatpush1.bf16.msra.mxu0 0
        %1840 = vmatprep.mubr.bf16.mxu0 0
        %1841 = vmatmul.mubr.bf16.gmra.mrb[0].mxu0 %v1742
        %v1842 = vpop.f32.mrb[0].mxu0
        %v1843 = vadd.f32 0.0, %v1842
        %v1844 = vpop.f32.mrb[0].mxu0
        %v1845 = vpop.f32.mrb[0].mxu0
        %v1846 = vpop.f32.mrb[0].mxu0
        %1847 = vdwg.mxu0
        %v1864 = vunpack.c.l.b16 %v1720
        %v1865 = vunpack.c.l.b16 %v1721
        %v1866 = vunpack.c.l.b16 %v1722
        %v1867 = vunpack.c.l.b16 %v1723
        %v1868 = vunpack.c.l.b16 %v1724
        %v1869 = vunpack.c.l.b16 %v1725
        %v1870 = vunpack.c.l.b16 %v1726
        %v1871 = vunpack.c.l.b16 %v1727
        %v1872 = vunpack.c.l.b16 %v1728
        %v1873 = vunpack.c.l.b16 %v1729
        %v1874 = vunpack.c.l.b16 %v1730
        %v1875 = vunpack.c.l.b16 %v1731
        %v1876 = vunpack.c.l.b16 %v1732
        %v1877 = vunpack.c.l.b16 %v1733
        %v1878 = vunpack.c.l.b16 %v1734
        %v1879 = vunpack.c.l.b16 %v1735
        %v1880 = vpack.c.b16 %v1865, %v1864
        %v1881 = vpack.c.b16 %v1867, %v1866
        %v1882 = vpack.c.b16 %v1869, %v1868
        %v1883 = vpack.c.b16 %v1871, %v1870
        %v1884 = vpack.c.b16 %v1873, %v1872
        %v1885 = vpack.c.b16 %v1875, %v1874
        %v1886 = vpack.c.b16 %v1877, %v1876
        %v1887 = vpack.c.b16 %v1879, %v1878
        %1896 = vmatprep.subr.bf16.mxu0 0
        %1897 = vmatpush1.bf16.msra.mxu0 %v1880
        %1898 = vmatprep.subr.bf16.mxu0 0
        %1899 = vmatpush1.bf16.msra.mxu0 %v1881
        %1900 = vmatprep.subr.bf16.mxu0 0
        %1901 = vmatpush1.bf16.msra.mxu0 %v1882
        %1902 = vmatprep.subr.bf16.mxu0 0
        %1903 = vmatpush1.bf16.msra.mxu0 %v1883
        %1904 = vmatprep.subr.bf16.mxu0 0
        %1905 = vmatpush1.bf16.msra.mxu0 %v1884
        %1906 = vmatprep.subr.bf16.mxu0 0
        %1907 = vmatpush1.bf16.msra.mxu0 %v1885
        %1908 = vmatprep.subr.bf16.mxu0 0
        %1909 = vmatpush1.bf16.msra.mxu0 %v1886
        %1910 = vmatprep.subr.bf16.mxu0 0
        %1911 = vmatpush1.bf16.msra.mxu0 %v1887
        %1912 = vmatprep.subr.bf16.mxu0 0
        %1913 = vmatpush1.bf16.msra.mxu0 0
        %1914 = vmatprep.subr.bf16.mxu0 0
        %1915 = vmatpush1.bf16.msra.mxu0 0
        %1916 = vmatprep.subr.bf16.mxu0 0
        %1917 = vmatpush1.bf16.msra.mxu0 0
        %1918 = vmatprep.subr.bf16.mxu0 0
        %1919 = vmatpush1.bf16.msra.mxu0 0
        %1920 = vmatprep.subr.bf16.mxu0 0
        %1921 = vmatpush1.bf16.msra.mxu0 0
        %1922 = vmatprep.subr.bf16.mxu0 0
        %1923 = vmatpush1.bf16.msra.mxu0 0
        %1924 = vmatprep.subr.bf16.mxu0 0
        %1925 = vmatpush1.bf16.msra.mxu0 0
        %1926 = vmatprep.subr.bf16.mxu0 0
        %1927 = vmatpush1.bf16.msra.mxu0 0
        %1928 = vmatprep.mubr.bf16.mxu0 0
        %1929 = vmatmul.mubr.bf16.gmra.mrb[0].mxu0 %v1719
        %v1930 = vpop.f32.mrb[0].mxu0
        %v1931 = vadd.f32 %v1843, %v1930
        %v1932 = vpop.f32.mrb[0].mxu0
        %v1933 = vpop.f32.mrb[0].mxu0
        %v1934 = vpop.f32.mrb[0].mxu0
        %1935 = vdwg.mxu0
        %v1937 = vrot.slane %v1704, 4
        %v1939 = vmax.f32 %v1704, %v1937
        %v1940 = vadd.f32 %v1939, %v1715
        %v1941 = vmax.f32 %v1940, 0.0
        %v1942 = vpack.c.bf16 %v1941, %v1941
        %s1943 = scalar_lea.vmem %s6, 128
        %v1944 = vld [vmem:[%s1943] sm:$0xf]
        %v1945 = vld [vmem:[%s1943 + $0x4] sm:$0xf]
        %v1946 = vld [vmem:[%s1943 + $0x8] sm:$0xf]
        %v1947 = vld [vmem:[%s1943 + $0xc] sm:$0xf]
        %v1948 = vld [vmem:[%s1943 + $0x10] sm:$0xf]
        %v1949 = vld [vmem:[%s1943 + $0x14] sm:$0xf]
        %v1950 = vld [vmem:[%s1943 + $0x18] sm:$0xf]
        %v1951 = vld [vmem:[%s1943 + $0x1c] sm:$0xf]
        %v1952 = vld [vmem:[%s1943 + $0x20] sm:$0xf]
        %v1953 = vld [vmem:[%s1943 + $0x24] sm:$0xf]
        %v1954 = vld [vmem:[%s1943 + $0x28] sm:$0xf]
        %v1955 = vld [vmem:[%s1943 + $0x2c] sm:$0xf]
        %v1956 = vld [vmem:[%s1943 + $0x30] sm:$0xf]
        %v1957 = vld [vmem:[%s1943 + $0x34] sm:$0xf]
        %v1958 = vld [vmem:[%s1943 + $0x38] sm:$0xf]
        %v1959 = vld [vmem:[%s1943 + $0x3c] sm:$0xf]
        %v1976 = vunpack.c.l.b16 %v1944
        %v1977 = vunpack.c.l.b16 %v1945
        %v1978 = vunpack.c.l.b16 %v1946
        %v1979 = vunpack.c.l.b16 %v1947
        %v1980 = vunpack.c.l.b16 %v1948
        %v1981 = vunpack.c.l.b16 %v1949
        %v1982 = vunpack.c.l.b16 %v1950
        %v1983 = vunpack.c.l.b16 %v1951
        %v1984 = vunpack.c.l.b16 %v1952
        %v1985 = vunpack.c.l.b16 %v1953
        %v1986 = vunpack.c.l.b16 %v1954
        %v1987 = vunpack.c.l.b16 %v1955
        %v1988 = vunpack.c.l.b16 %v1956
        %v1989 = vunpack.c.l.b16 %v1957
        %v1990 = vunpack.c.l.b16 %v1958
        %v1991 = vunpack.c.l.b16 %v1959
        %v1992 = vpack.c.b16 %v1977, %v1976
        %v1993 = vpack.c.b16 %v1979, %v1978
        %v1994 = vpack.c.b16 %v1981, %v1980
        %v1995 = vpack.c.b16 %v1983, %v1982
        %v1996 = vpack.c.b16 %v1985, %v1984
        %v1997 = vpack.c.b16 %v1987, %v1986
        %v1998 = vpack.c.b16 %v1989, %v1988
        %v1999 = vpack.c.b16 %v1991, %v1990
        %2008 = vmatprep.subr.bf16.mxu0 0
        %2009 = vmatpush1.bf16.msra.mxu0 %v1992
        %2010 = vmatprep.subr.bf16.mxu0 0
        %2011 = vmatpush1.bf16.msra.mxu0 %v1993
        %2012 = vmatprep.subr.bf16.mxu0 0
        %2013 = vmatpush1.bf16.msra.mxu0 %v1994
        %2014 = vmatprep.subr.bf16.mxu0 0
        %2015 = vmatpush1.bf16.msra.mxu0 %v1995
        %2016 = vmatprep.subr.bf16.mxu0 0
        %2017 = vmatpush1.bf16.msra.mxu0 %v1996
        %2018 = vmatprep.subr.bf16.mxu0 0
        %2019 = vmatpush1.bf16.msra.mxu0 %v1997
        %2020 = vmatprep.subr.bf16.mxu0 0
        %2021 = vmatpush1.bf16.msra.mxu0 %v1998
        %2022 = vmatprep.subr.bf16.mxu0 0
        %2023 = vmatpush1.bf16.msra.mxu0 %v1999
        %2024 = vmatprep.subr.bf16.mxu0 0
        %2025 = vmatpush1.bf16.msra.mxu0 0
        %2026 = vmatprep.subr.bf16.mxu0 0
        %2027 = vmatpush1.bf16.msra.mxu0 0
        %2028 = vmatprep.subr.bf16.mxu0 0
        %2029 = vmatpush1.bf16.msra.mxu0 0
        %2030 = vmatprep.subr.bf16.mxu0 0
        %2031 = vmatpush1.bf16.msra.mxu0 0
        %2032 = vmatprep.subr.bf16.mxu0 0
        %2033 = vmatpush1.bf16.msra.mxu0 0
        %2034 = vmatprep.subr.bf16.mxu0 0
        %2035 = vmatpush1.bf16.msra.mxu0 0
        %2036 = vmatprep.subr.bf16.mxu0 0
        %2037 = vmatpush1.bf16.msra.mxu0 0
        %2038 = vmatprep.subr.bf16.mxu0 0
        %2039 = vmatpush1.bf16.msra.mxu0 0
        %2040 = vmatprep.mubr.bf16.mxu0 0
        %2041 = vmatmul.mubr.bf16.gmra.mrb[0].mxu0 %v1942
        %v2042 = vpop.f32.mrb[0].mxu0
        %v2043 = vadd.f32 0.0, %v2042
        %v2044 = vpop.f32.mrb[0].mxu0
        %v2045 = vpop.f32.mrb[0].mxu0
        %v2046 = vpop.f32.mrb[0].mxu0
        %2047 = vdwg.mxu0
        %v2048 = vadd.f32 %v1931, %v2043
        %v2050 = vrot.slane %v1705, 4
        %v2052 = vmax.f32 %v1705, %v2050
        %v2053 = vadd.f32 %v2052, %v1715
        %v2054 = vmax.f32 %v2053, 0.0
        %v2055 = vpack.c.bf16 %v2054, %v2054
        %s2056 = scalar_lea.vmem %s6, 192
        %v2057 = vld [vmem:[%s2056] sm:$0xf]
        %v2058 = vld [vmem:[%s2056 + $0x4] sm:$0xf]
        %v2059 = vld [vmem:[%s2056 + $0x8] sm:$0xf]
        %v2060 = vld [vmem:[%s2056 + $0xc] sm:$0xf]
        %v2061 = vld [vmem:[%s2056 + $0x10] sm:$0xf]
        %v2062 = vld [vmem:[%s2056 + $0x14] sm:$0xf]
        %v2063 = vld [vmem:[%s2056 + $0x18] sm:$0xf]
        %v2064 = vld [vmem:[%s2056 + $0x1c] sm:$0xf]
        %v2065 = vld [vmem:[%s2056 + $0x20] sm:$0xf]
        %v2066 = vld [vmem:[%s2056 + $0x24] sm:$0xf]
        %v2067 = vld [vmem:[%s2056 + $0x28] sm:$0xf]
        %v2068 = vld [vmem:[%s2056 + $0x2c] sm:$0xf]
        %v2069 = vld [vmem:[%s2056 + $0x30] sm:$0xf]
        %v2070 = vld [vmem:[%s2056 + $0x34] sm:$0xf]
        %v2071 = vld [vmem:[%s2056 + $0x38] sm:$0xf]
        %v2072 = vld [vmem:[%s2056 + $0x3c] sm:$0xf]
        %v2089 = vunpack.c.l.b16 %v2057
        %v2090 = vunpack.c.l.b16 %v2058
        %v2091 = vunpack.c.l.b16 %v2059
        %v2092 = vunpack.c.l.b16 %v2060
        %v2093 = vunpack.c.l.b16 %v2061
        %v2094 = vunpack.c.l.b16 %v2062
        %v2095 = vunpack.c.l.b16 %v2063
        %v2096 = vunpack.c.l.b16 %v2064
        %v2097 = vunpack.c.l.b16 %v2065
        %v2098 = vunpack.c.l.b16 %v2066
        %v2099 = vunpack.c.l.b16 %v2067
        %v2100 = vunpack.c.l.b16 %v2068
        %v2101 = vunpack.c.l.b16 %v2069
        %v2102 = vunpack.c.l.b16 %v2070
        %v2103 = vunpack.c.l.b16 %v2071
        %v2104 = vunpack.c.l.b16 %v2072
        %v2105 = vpack.c.b16 %v2090, %v2089
        %v2106 = vpack.c.b16 %v2092, %v2091
        %v2107 = vpack.c.b16 %v2094, %v2093
        %v2108 = vpack.c.b16 %v2096, %v2095
        %v2109 = vpack.c.b16 %v2098, %v2097
        %v2110 = vpack.c.b16 %v2100, %v2099
        %v2111 = vpack.c.b16 %v2102, %v2101
        %v2112 = vpack.c.b16 %v2104, %v2103
        %2121 = vmatprep.subr.bf16.mxu0 0
        %2122 = vmatpush1.bf16.msra.mxu0 %v2105
        %2123 = vmatprep.subr.bf16.mxu0 0
        %2124 = vmatpush1.bf16.msra.mxu0 %v2106
        %2125 = vmatprep.subr.bf16.mxu0 0
        %2126 = vmatpush1.bf16.msra.mxu0 %v2107
        %2127 = vmatprep.subr.bf16.mxu0 0
        %2128 = vmatpush1.bf16.msra.mxu0 %v2108
        %2129 = vmatprep.subr.bf16.mxu0 0
        %2130 = vmatpush1.bf16.msra.mxu0 %v2109
        %2131 = vmatprep.subr.bf16.mxu0 0
        %2132 = vmatpush1.bf16.msra.mxu0 %v2110
        %2133 = vmatprep.subr.bf16.mxu0 0
        %2134 = vmatpush1.bf16.msra.mxu0 %v2111
        %2135 = vmatprep.subr.bf16.mxu0 0
        %2136 = vmatpush1.bf16.msra.mxu0 %v2112
        %2137 = vmatprep.subr.bf16.mxu0 0
        %2138 = vmatpush1.bf16.msra.mxu0 0
        %2139 = vmatprep.subr.bf16.mxu0 0
        %2140 = vmatpush1.bf16.msra.mxu0 0
        %2141 = vmatprep.subr.bf16.mxu0 0
        %2142 = vmatpush1.bf16.msra.mxu0 0
        %2143 = vmatprep.subr.bf16.mxu0 0
        %2144 = vmatpush1.bf16.msra.mxu0 0
        %2145 = vmatprep.subr.bf16.mxu0 0
        %2146 = vmatpush1.bf16.msra.mxu0 0
        %2147 = vmatprep.subr.bf16.mxu0 0
        %2148 = vmatpush1.bf16.msra.mxu0 0
        %2149 = vmatprep.subr.bf16.mxu0 0
        %2150 = vmatpush1.bf16.msra.mxu0 0
        %2151 = vmatprep.subr.bf16.mxu0 0
        %2152 = vmatpush1.bf16.msra.mxu0 0
        %2153 = vmatprep.mubr.bf16.mxu0 0
        %2154 = vmatmul.mubr.bf16.gmra.mrb[0].mxu0 %v2055
        %v2155 = vpop.f32.mrb[0].mxu0
        %v2156 = vadd.f32 0.0, %v2155
        %v2157 = vpop.f32.mrb[0].mxu0
        %v2158 = vpop.f32.mrb[0].mxu0
        %v2159 = vpop.f32.mrb[0].mxu0
        %2160 = vdwg.mxu0
        %v2161 = vadd.f32 %v2048, %v2156
        %v2162 = vld [vmem:[%s7] sm:$0x1]
        %v2164 = vlaneseq
        %v2165 = vshrl.u32 %v2164, 7
        %v2166 = vsub.s32 0, %v2165
        %v2167 = vrot.slane %v2162, %v2166
        %v2169 = vadd.f32 %v2161, %v2167
        %v2170 = vmax.f32 %v2169, 0.0
        %v2171 = vpack.c.bf16 %v2170, %v2170
        %v2172 = vld [vmem:[%s8] sm:$0xf]
        %v2173 = vld [vmem:[%s8 + $0x4] sm:$0xf]
        %v2174 = vld [vmem:[%s8 + $0x8] sm:$0xf]
        %v2175 = vld [vmem:[%s8 + $0xc] sm:$0xf]
        %v2176 = vld [vmem:[%s8 + $0x10] sm:$0xf]
        %v2177 = vld [vmem:[%s8 + $0x14] sm:$0xf]
        %v2178 = vld [vmem:[%s8 + $0x18] sm:$0xf]
        %v2179 = vld [vmem:[%s8 + $0x1c] sm:$0xf]
        %v2180 = vld [vmem:[%s8 + $0x20] sm:$0xf]
        %v2181 = vld [vmem:[%s8 + $0x24] sm:$0xf]
        %v2182 = vld [vmem:[%s8 + $0x28] sm:$0xf]
        %v2183 = vld [vmem:[%s8 + $0x2c] sm:$0xf]
        %v2184 = vld [vmem:[%s8 + $0x30] sm:$0xf]
        %v2185 = vld [vmem:[%s8 + $0x34] sm:$0xf]
        %v2186 = vld [vmem:[%s8 + $0x38] sm:$0xf]
        %v2187 = vld [vmem:[%s8 + $0x3c] sm:$0xf]
        %v2188 = vld [vmem:[%s9] sm:$0x1]
        %v2190 = vlaneseq
        %v2191 = vshrl.u32 %v2190, 7
        %v2192 = vsub.s32 0, %v2191
        %v2193 = vrot.slane %v2188, %v2192
        %v2211 = vunpack.c.l.b16 %v2172
        %v2212 = vunpack.c.l.b16 %v2173
        %v2213 = vunpack.c.l.b16 %v2174
        %v2214 = vunpack.c.l.b16 %v2175
        %v2215 = vunpack.c.l.b16 %v2176
        %v2216 = vunpack.c.l.b16 %v2177
        %v2217 = vunpack.c.l.b16 %v2178
        %v2218 = vunpack.c.l.b16 %v2179
        %v2219 = vunpack.c.l.b16 %v2180
        %v2220 = vunpack.c.l.b16 %v2181
        %v2221 = vunpack.c.l.b16 %v2182
        %v2222 = vunpack.c.l.b16 %v2183
        %v2223 = vunpack.c.l.b16 %v2184
        %v2224 = vunpack.c.l.b16 %v2185
        %v2225 = vunpack.c.l.b16 %v2186
        %v2226 = vunpack.c.l.b16 %v2187
        %v2227 = vpack.c.b16 %v2212, %v2211
        %v2228 = vpack.c.b16 %v2214, %v2213
        %v2229 = vpack.c.b16 %v2216, %v2215
        %v2230 = vpack.c.b16 %v2218, %v2217
        %v2231 = vpack.c.b16 %v2220, %v2219
        %v2232 = vpack.c.b16 %v2222, %v2221
        %v2233 = vpack.c.b16 %v2224, %v2223
        %v2234 = vpack.c.b16 %v2226, %v2225
        %2243 = vmatprep.subr.bf16.mxu0 0
        %2244 = vmatpush1.bf16.msra.mxu0 %v2227
        %2245 = vmatprep.subr.bf16.mxu0 0
        %2246 = vmatpush1.bf16.msra.mxu0 %v2228
        %2247 = vmatprep.subr.bf16.mxu0 0
        %2248 = vmatpush1.bf16.msra.mxu0 %v2229
        %2249 = vmatprep.subr.bf16.mxu0 0
        %2250 = vmatpush1.bf16.msra.mxu0 %v2230
        %2251 = vmatprep.subr.bf16.mxu0 0
        %2252 = vmatpush1.bf16.msra.mxu0 %v2231
        %2253 = vmatprep.subr.bf16.mxu0 0
        %2254 = vmatpush1.bf16.msra.mxu0 %v2232
        %2255 = vmatprep.subr.bf16.mxu0 0
        %2256 = vmatpush1.bf16.msra.mxu0 %v2233
        %2257 = vmatprep.subr.bf16.mxu0 0
        %2258 = vmatpush1.bf16.msra.mxu0 %v2234
        %2259 = vmatprep.subr.bf16.mxu0 0
        %2260 = vmatpush1.bf16.msra.mxu0 0
        %2261 = vmatprep.subr.bf16.mxu0 0
        %2262 = vmatpush1.bf16.msra.mxu0 0
        %2263 = vmatprep.subr.bf16.mxu0 0
        %2264 = vmatpush1.bf16.msra.mxu0 0
        %2265 = vmatprep.subr.bf16.mxu0 0
        %2266 = vmatpush1.bf16.msra.mxu0 0
        %2267 = vmatprep.subr.bf16.mxu0 0
        %2268 = vmatpush1.bf16.msra.mxu0 0
        %2269 = vmatprep.subr.bf16.mxu0 0
        %2270 = vmatpush1.bf16.msra.mxu0 0
        %2271 = vmatprep.subr.bf16.mxu0 0
        %2272 = vmatpush1.bf16.msra.mxu0 0
        %2273 = vmatprep.subr.bf16.mxu0 0
        %2274 = vmatpush1.bf16.msra.mxu0 0
        %2275 = vmatprep.mubr.bf16.mxu0 0
        %2276 = vmatmul.mubr.bf16.gmra.mrb[0].mxu0 %v2171
        %v2277 = vpop.f32.mrb[0].mxu0
        %v2278 = vadd.f32 %v2193, %v2277
        %v2279 = vpop.f32.mrb[0].mxu0
        %v2280 = vpop.f32.mrb[0].mxu0
        %v2281 = vpop.f32.mrb[0].mxu0
        %2282 = vdwg.mxu0
        %v2284 = vrot.slane %v2278, 1
        %v2286 = vadd.f32 %v2278, %v2284
        %v2287 = vrot.slane %v2278, 2
        %v2289 = vadd.f32 %v2286, %v2287
        %v2290 = vrot.slane %v2278, 3
        %v2292 = vadd.f32 %v2289, %v2290
        %v2293 = vmul.f32 %v2292, 0.25
        %2294 = vst [vmem:[%s351] sm:$0x1] %v2293
        %s2295 = sand.u32 %s247, 1
        %s2296 = scalar_lea.sflag [#allocation3], %s2295
        %s2297 = sand.u32 %s247, 1
        %s2298 = scalar_lea.vmem [#allocation2], %s2297
        // Predicated region
        $region61: #{rotation_invariant_gabor_cnn.1} parent=59 // pred_check
          %p2299 = pneg %p257
        $region62: #{rotation_invariant_gabor_cnn.1} parent=59 // pred_check_branch
          %2301 = sbr.rel (%p2299) target = $region64
        $region63: #{rotation_invariant_gabor_cnn.1} parent=59 // pred_region
          %s2303 = ssub.s32 16, 16
          %2304 = vsyncadd %s2296, %s2303
          %s2305 = smul.addr %s24, 16
          %s2306 = scalar_lea.hbm %s10, %s2305
          %s2308 = sshll.u32 %s2298, 4
          %s2309 = int_to_ptr.vmem [resolvable:$true] %s2308
          %2311 = dma.vmem_to_hbm [thread:$0]  %s2309, 16, %s2306, %s2296
        $region64: #{rotation_invariant_gabor_cnn.1} parent=59 // pred_fallthru
          _
      $region60: #{rotation_invariant_gabor_cnn.1} parent=5 // pred_fallthru
        _
      %p2312 = scmp.le.s32.totalorder 2, %s19
      // Predicated region
      $region65: #{rotation_invariant_gabor_cnn.1} parent=5 // pred_check
        %p2313 = pneg %p2312
      $region66: #{rotation_invariant_gabor_cnn.1} parent=5 // pred_check_branch
        %2315 = sbr.rel (%p2313) target = $region68
      $region67: #{rotation_invariant_gabor_cnn.1} parent=5 // pred_region
        %s2316 = ssub.s32 %s19, 2
        // Predicated region
        $region69: #{rotation_invariant_gabor_cnn.1} parent=67 // pred_check
          %p2317 = pneg %p263
        $region70: #{rotation_invariant_gabor_cnn.1} parent=67 // pred_check_branch
          %2319 = sbr.rel (%p2317) target = $region72
        $region71: #{rotation_invariant_gabor_cnn.1} parent=67 // pred_region
          %s2320 = sand.u32 %s248, 1
          %s2321 = scalar_lea.sflag [#allocation3], %s2320
          %s2322 = sand.u32 %s248, 1
          %s2323 = scalar_lea.vmem [#allocation2], %s2322
          %2324 = dma.done %s2321, 16
        $region72: #{rotation_invariant_gabor_cnn.1} parent=67 // pred_fallthru
          _
      $region68: #{rotation_invariant_gabor_cnn.1} parent=5 // pred_fallthru
        _
    $region6: #{rotation_invariant_gabor_cnn.1} parent=1 // loop_footer
      %s23 = sadd.s32 1, %s19
    $region7: #{rotation_invariant_gabor_cnn.1} parent=1 // loop_footer_branch
      %18 = sbr.rel target = $region3
    $region8: #{rotation_invariant_gabor_cnn.1} parent=1 // loop_exit
      _
    %2325 = vsyncpa [#allocation3], 1
    %s2326 = scalar_lea.sflag [#allocation3], 1
    %2327 = vsyncpa %s2326, 1

</llo_original>
